<compile_context>
chip_gen: v7x
topology: tpu7x:2x2x1
jax: 0.10.0
libtpu: 0.0.40
codegen_flags: <defaults>
</compile_context>

<pallas_src>
import functools

import jax
import jax.numpy as jnp
from jax.experimental import pallas as pl
from jax.experimental.pallas import tpu as pltpu


def _pedec_kernel(x_ref, w_enc_ref, b_enc_ref, w_lin_ref, emb_ref, b_lin_ref,
                  out_ref, acc_ref, *, tiny_cin):
    """One (batch-tile, spatial-tile) grid step of the SN projection head.

    x_ref     : (b_tile, hw_tile, Cin)  bf16, flattened-spatial channels-last
    w_enc_ref : (Cin, F)                bf16 1x1-conv weight (encoder stand-in)
    b_enc_ref : (1, F)                  f32
    w_lin_ref : (1, F)                  f32 spectral-normalized linear (transposed)
    emb_ref   : (b_tile, F)             f32 spectral-normalized class embedding
    b_lin_ref : (1, 1)                  f32 scalar in SMEM
    out_ref   : (1, b_tile)             f32 lane-dense output
    acc_ref   : (b_tile, F)             f32 sum-pool accumulator (scratch)
    """
    hw_i = pl.program_id(1)

    @pl.when(hw_i == 0)
    def _init():
        acc_ref[...] = jnp.zeros_like(acc_ref)

    b_tile, hw_tile, cin = x_ref.shape
    f = acc_ref.shape[1]

    # Flatten to a clean 2-D (M, K) problem; free when hw_tile % 8 == 0.
    x2 = x_ref[...].reshape(b_tile * hw_tile, cin)

    if tiny_cin:
        # K is tiny (e.g. RGB-like inputs): unroll Cin FMAs on the VPU instead
        # of running the MXU at ~K/128 utilization.  Elementwise math in f32
        # (v5e VPU has no bf16).
        xf = x2.astype(jnp.float32)
        wf = w_enc_ref[...].astype(jnp.float32)
        feat = xf[:, 0:1] * wf[0:1, :]
        for c in range(1, cin):
            feat = feat + xf[:, c:c + 1] * wf[c:c + 1, :]
    else:
        # bf16 x bf16 -> f32 accumulate on the MXU.
        feat = jnp.dot(x2, w_enc_ref[...], preferred_element_type=jnp.float32)

    feat = jnp.maximum(feat + b_enc_ref[...], 0.0)            # bias + ReLU (f32)

    # Partial global sum-pool over this spatial tile, accumulated in f32.
    acc_ref[...] += jnp.sum(feat.reshape(b_tile, hw_tile, f), axis=1)

    @pl.when(hw_i == pl.num_programs(1) - 1)
    def _finalize():
        h = acc_ref[...]                                      # (b_tile, F)
        # Fused head: linear(h) + sum(embed(y)*h) == sum(h * (emb + w_lin^T)).
        w_comb = emb_ref[...] + w_lin_ref[...]                # (b_tile,F)+(1,F)
        logit = jnp.sum(h * w_comb, axis=1) + b_lin_ref[0, 0]
        out_ref[...] = logit[None, :].astype(out_ref.dtype)   # lane-dense (1, b_tile)


def _spectral_normalize(w, key, n_iter=1):
    """One-shot power-iteration spectral norm (parameter glue, not hot path)."""
    w2 = w.reshape(w.shape[0], -1)
    u = jax.random.normal(key, (w2.shape[0],), jnp.float32)
    u = u / (jnp.linalg.norm(u) + 1e-12)
    v = None
    for _ in range(n_iter):
        v = w2.T @ u
        v = v / (jnp.linalg.norm(v) + 1e-12)
        u = w2 @ v
        u = u / (jnp.linalg.norm(u) + 1e-12)
    sigma = u @ (w2 @ v)
    return w / (sigma + 1e-12)


def _choose_hw_tile(b_tile, hw, cin, f, budget_bytes):
    """Largest spatial tile (divisor of HW, multiple of 8) fitting the budget."""
    best_t, best_est = None, None
    for t in range(hw, 0, -1):
        if hw % t != 0 or not (t % 8 == 0 or t == hw):
            continue
        x_blk = 2 * b_tile * t * cin * 2          # bf16 input, double-buffered
        feat = b_tile * t * f * 4                  # f32 activation tile
        acc = b_tile * f * 4                       # accumulator scratch
        small = 2 * (cin * f * 2 + 3 * f * 4 + b_tile * f * 4)
        est = x_blk + feat + acc + small
        if best_t is None:
            best_t, best_est = t, est              # smallest-fallback if nothing fits
        if est <= budget_bytes:
            return t, est
        best_t, best_est = t, est
    return best_t, best_est


def snpd_pedec_forward(x_nchw, y, w_enc, b_enc, w_lin, b_lin, emb_table):
    B, C, H, W = x_nchw.shape
    F = w_enc.shape[1]
    HW = H * W

    # NCHW -> (B, H*W, C): the 1x1 conv becomes a lane-friendly matmul over C.
    x3 = jnp.transpose(x_nchw, (0, 2, 3, 1)).reshape(B, HW, C).astype(jnp.bfloat16)
    w_enc_bf = w_enc.astype(jnp.bfloat16)
    b_enc2 = b_enc.reshape(1, F).astype(jnp.float32)
    w_lin_t = w_lin.reshape(1, F).astype(jnp.float32)     # transposed linear weight
    b_lin_s = b_lin.reshape(1, 1).astype(jnp.float32)
    emb = emb_table[y].astype(jnp.float32)                # (B, F) class-embedding gather

    # Batch tile: keep full B when small; 128-wide (lane-dense output) when large.
    b_tile = 128 if (B % 128 == 0) else B
    # Tile budget sized for the smallest scoped VMEM across v5e/v6e/v7x.
    budget = 20 * (1 << 20)
    hw_tile, est = _choose_hw_tile(b_tile, HW, C, F, budget)
    vmem_limit = int(min(48 * (1 << 20), max(2 * est, 16 * (1 << 20))))

    grid = (B // b_tile, HW // hw_tile)
    kernel = functools.partial(_pedec_kernel, tiny_cin=(C <= 8))

    out = pl.pallas_call(
        kernel,
        out_shape=jax.ShapeDtypeStruct((1, B), jnp.float32),
        grid=grid,
        in_specs=[
            pl.BlockSpec((b_tile, hw_tile, C), lambda bi, si: (bi, si, 0)),
            pl.BlockSpec((C, F), lambda bi, si: (0, 0)),
            pl.BlockSpec((1, F), lambda bi, si: (0, 0)),
            pl.BlockSpec((1, F), lambda bi, si: (0, 0)),
            pl.BlockSpec((b_tile, F), lambda bi, si: (bi, 0)),
            pl.BlockSpec(memory_space=pltpu.MemorySpace.SMEM),     # b_lin scalar
        ],
        out_specs=pl.BlockSpec((1, b_tile), lambda bi, si: (0, bi)),
        scratch_shapes=[pltpu.VMEM((b_tile, F), jnp.float32)],
        compiler_params=pltpu.CompilerParams(
            dimension_semantics=("parallel", "arbitrary"),
            vmem_limit_bytes=vmem_limit),
    )(x3, w_enc_bf, b_enc2, w_lin_t, emb, b_lin_s)

    return out.reshape(B, 1)


if __name__ == "__main__":
    key = jax.random.PRNGKey(0)
    k_x, k_we, k_wl, k_emb, k_sn1, k_sn2 = jax.random.split(key, 6)

    # Small shapes consistent with the module: batch=2, in-channels=4,
    # spatial=16x16, num_features=32, num_classes=10.
    B, C, H, W = 2, 4, 16, 16
    NUM_FEATURES = 32
    NUM_CLASSES = 10

    x = jax.random.normal(k_x, (B, C, H, W), dtype=jnp.float32)
    y = jnp.array([1, 3], dtype=jnp.int32)

    # Deterministic parameter init (encoder stand-in + SN head).
    w_enc = 0.1 * jax.random.normal(k_we, (C, NUM_FEATURES), jnp.float32)
    b_enc = jnp.zeros((1, NUM_FEATURES), jnp.float32)
    w_lin = 0.1 * jax.random.normal(k_wl, (NUM_FEATURES, 1), jnp.float32)
    b_lin = jnp.zeros((1, 1), jnp.float32)
    emb_table = 0.1 * jax.random.normal(
        k_emb, (NUM_CLASSES, NUM_FEATURES), jnp.float32)

    # Spectral normalization (parameter re-parameterization, plain-JAX glue).
    w_lin = _spectral_normalize(w_lin, k_sn1)
    emb_table = _spectral_normalize(emb_table, k_sn2)

    out = snpd_pedec_forward(x, y, w_enc, b_enc, w_lin, b_lin, emb_table)
    out = jax.block_until_ready(out)
    assert out.shape == (B, 1)

    # Reference check (inputs are fed to the kernel in bf16, so compare against
    # the same bf16-quantized inputs with loose tolerance).
    x_q = jnp.transpose(x, (0, 2, 3, 1)).reshape(B, H * W, C)
    x_q = x_q.astype(jnp.bfloat16).astype(jnp.float32)
    w_q = w_enc.astype(jnp.bfloat16).astype(jnp.float32)
    feat_ref = jnp.maximum(jnp.einsum("bsc,cf->bsf", x_q, w_q) + b_enc, 0.0)
    h_ref = feat_ref.sum(axis=1)
    ref = h_ref @ w_lin + b_lin + jnp.sum(emb_table[y] * h_ref,
                                          axis=1, keepdims=True)
    assert jnp.allclose(out, ref, rtol=2e-2, atol=2e-2)

    print("KERNEL_OK")
</pallas_src>

<mosaic_0001>
module attributes {stable_mosaic.version = 11 : i64} {
  func.func @_pedec_kernel(%arg0: i32, %arg1: i32, %arg2: memref<2x256x4xbf16, #tpu.memory_space<vmem>>, %arg3: memref<4x32xbf16, #tpu.memory_space<vmem>>, %arg4: memref<1x32xf32, #tpu.memory_space<vmem>>, %arg5: memref<1x32xf32, #tpu.memory_space<vmem>>, %arg6: memref<2x32xf32, #tpu.memory_space<vmem>>, %arg7: memref<1x1xf32, #tpu.memory_space<smem>>, %arg8: memref<1x2xf32, #tpu.memory_space<vmem>>, %arg9: memref<2x32xf32, #tpu.memory_space<vmem>>) attributes {dimension_semantics = [#tpu.dimension_semantics<parallel>, #tpu.dimension_semantics<arbitrary>], iteration_bounds = array<i64: 1, 1>, scalar_prefetch = 0 : i64, scratch_operands = 1 : i64, tpu.core_type = #tpu.core_type<tc>, window_params = [{transform_indices = @transform_0, window_bounds = array<i64: 2, 256, 4>}, {pipeline_mode = #tpu.pipeline_mode<synchronous>, transform_indices = @transform_1, window_bounds = array<i64: 4, 32>}, {pipeline_mode = #tpu.pipeline_mode<synchronous>, transform_indices = @transform_2, window_bounds = array<i64: 1, 32>}, {pipeline_mode = #tpu.pipeline_mode<synchronous>, transform_indices = @transform_3, window_bounds = array<i64: 1, 32>}, {transform_indices = @transform_4, window_bounds = array<i64: 2, 32>}, {transform_indices = @transform_5, window_bounds = array<i64: 1, 1>}, {transform_indices = @transform_6, window_bounds = array<i64: 1, 2>}]} {
    %c0_i32 = arith.constant 0 : i32
    %0 = arith.cmpi eq, %arg1, %c0_i32 : i32
    %1 = arith.extui %0 : i1 to i32
    %c0_i32_0 = arith.constant 0 : i32
    %2 = arith.cmpi ne, %1, %c0_i32_0 : i32
    scf.if %2 {
      %cst_14 = arith.constant 0.000000e+00 : f32
      %44 = vector.broadcast %cst_14 : f32 to vector<2x32xf32>
      %c0_15 = arith.constant 0 : index
      %c0_16 = arith.constant 0 : index
      %45 = vector.load %arg9[%c0_15, %c0_16] : memref<2x32xf32, #tpu.memory_space<vmem>>, vector<2x32xf32>
      tpu.vector_store %arg9[%c0_15, %c0_16], %44 {strides = array<i32>} : memref<2x32xf32, #tpu.memory_space<vmem>>, vector<2x32xf32>,
    } else {
    }
    %c0 = arith.constant 0 : index
    %c0_1 = arith.constant 0 : index
    %c0_2 = arith.constant 0 : index
    %3 = vector.load %arg2[%c0, %c0_1, %c0_2] : memref<2x256x4xbf16, #tpu.memory_space<vmem>>, vector<2x256x4xbf16>
    %4 = vector.shape_cast %3 : vector<2x256x4xbf16> to vector<512x4xbf16>
    %5 = arith.extf %4 : vector<512x4xbf16> to vector<512x4xf32>
    %c0_3 = arith.constant 0 : index
    %c0_4 = arith.constant 0 : index
    %6 = vector.load %arg3[%c0_3, %c0_4] : memref<4x32xbf16, #tpu.memory_space<vmem>>, vector<4x32xbf16>
    %7 = arith.extf %6 : vector<4x32xbf16> to vector<4x32xf32>
    %8 = vector.extract_strided_slice %5 {offsets = [0, 0], sizes = [512, 1], strides = [1, 1]} : vector<512x4xf32> to vector<512x1xf32>
    %9 = vector.extract_strided_slice %7 {offsets = [0, 0], sizes = [1, 32], strides = [1, 1]} : vector<4x32xf32> to vector<1x32xf32>
    %10 = vector.broadcast %8 : vector<512x1xf32> to vector<512x32xf32>
    %11 = vector.broadcast %9 : vector<1x32xf32> to vector<512x32xf32>
    %12 = arith.mulf %10, %11 : vector<512x32xf32>
    %13 = vector.extract_strided_slice %5 {offsets = [0, 1], sizes = [512, 1], strides = [1, 1]} : vector<512x4xf32> to vector<512x1xf32>
    %14 = vector.extract_strided_slice %7 {offsets = [1, 0], sizes = [1, 32], strides = [1, 1]} : vector<4x32xf32> to vector<1x32xf32>
    %15 = vector.broadcast %13 : vector<512x1xf32> to vector<512x32xf32>
    %16 = vector.broadcast %14 : vector<1x32xf32> to vector<512x32xf32>
    %17 = arith.mulf %15, %16 : vector<512x32xf32>
    %18 = arith.addf %12, %17 : vector<512x32xf32>
    %19 = vector.extract_strided_slice %5 {offsets = [0, 2], sizes = [512, 1], strides = [1, 1]} : vector<512x4xf32> to vector<512x1xf32>
    %20 = vector.extract_strided_slice %7 {offsets = [2, 0], sizes = [1, 32], strides = [1, 1]} : vector<4x32xf32> to vector<1x32xf32>
    %21 = vector.broadcast %19 : vector<512x1xf32> to vector<512x32xf32>
    %22 = vector.broadcast %20 : vector<1x32xf32> to vector<512x32xf32>
    %23 = arith.mulf %21, %22 : vector<512x32xf32>
    %24 = arith.addf %18, %23 : vector<512x32xf32>
    %25 = vector.extract_strided_slice %5 {offsets = [0, 3], sizes = [512, 1], strides = [1, 1]} : vector<512x4xf32> to vector<512x1xf32>
    %26 = vector.extract_strided_slice %7 {offsets = [3, 0], sizes = [1, 32], strides = [1, 1]} : vector<4x32xf32> to vector<1x32xf32>
    %27 = vector.broadcast %25 : vector<512x1xf32> to vector<512x32xf32>
    %28 = vector.broadcast %26 : vector<1x32xf32> to vector<512x32xf32>
    %29 = arith.mulf %27, %28 : vector<512x32xf32>
    %30 = arith.addf %24, %29 : vector<512x32xf32>
    %c0_5 = arith.constant 0 : index
    %c0_6 = arith.constant 0 : index
    %31 = vector.load %arg4[%c0_5, %c0_6] : memref<1x32xf32, #tpu.memory_space<vmem>>, vector<1x32xf32>
    %32 = vector.broadcast %31 : vector<1x32xf32> to vector<512x32xf32>
    %33 = arith.addf %30, %32 : vector<512x32xf32>
    %cst = arith.constant 0.000000e+00 : f32
    %34 = vector.broadcast %cst : f32 to vector<512x32xf32>
    %35 = arith.maximumf %33, %34 : vector<512x32xf32>
    %c0_7 = arith.constant 0 : index
    %c0_8 = arith.constant 0 : index
    %36 = vector.load %arg9[%c0_7, %c0_8] : memref<2x32xf32, #tpu.memory_space<vmem>>, vector<2x32xf32>
    %37 = vector.shape_cast %35 : vector<512x32xf32> to vector<2x256x32xf32>
    %cst_9 = arith.constant dense<0.000000e+00> : vector<2x32xf32>
    %38 = vector.multi_reduction <add>, %37, %cst_9 [1] : vector<2x256x32xf32> to vector<2x32xf32>
    %39 = arith.addf %36, %38 : vector<2x32xf32>
    %c0_10 = arith.constant 0 : index
    %c0_11 = arith.constant 0 : index
    %40 = vector.load %arg9[%c0_10, %c0_11] : memref<2x32xf32, #tpu.memory_space<vmem>>, vector<2x32xf32>
    tpu.vector_store %arg9[%c0_10, %c0_11], %39 {strides = array<i32>} : memref<2x32xf32, #tpu.memory_space<vmem>>, vector<2x32xf32>,
    %c0_i32_12 = arith.constant 0 : i32
    %41 = arith.cmpi eq, %arg1, %c0_i32_12 : i32
    %42 = arith.extui %41 : i1 to i32
    %c0_i32_13 = arith.constant 0 : i32
    %43 = arith.cmpi ne, %42, %c0_i32_13 : i32
    scf.if %43 {
      %c0_14 = arith.constant 0 : index
      %c0_15 = arith.constant 0 : index
      %44 = vector.load %arg9[%c0_14, %c0_15] : memref<2x32xf32, #tpu.memory_space<vmem>>, vector<2x32xf32>
      %c0_16 = arith.constant 0 : index
      %c0_17 = arith.constant 0 : index
      %45 = vector.load %arg6[%c0_16, %c0_17] : memref<2x32xf32, #tpu.memory_space<vmem>>, vector<2x32xf32>
      %c0_18 = arith.constant 0 : index
      %c0_19 = arith.constant 0 : index
      %46 = vector.load %arg5[%c0_18, %c0_19] : memref<1x32xf32, #tpu.memory_space<vmem>>, vector<1x32xf32>
      %47 = vector.broadcast %46 : vector<1x32xf32> to vector<2x32xf32>
      %48 = arith.addf %45, %47 : vector<2x32xf32>
      %49 = arith.mulf %44, %48 : vector<2x32xf32>
      %cst_20 = arith.constant dense<0.000000e+00> : vector<2xf32>
      %50 = vector.multi_reduction <add>, %49, %cst_20 [1] : vector<2x32xf32> to vector<2xf32>
      %c0_21 = arith.constant 0 : index
      %c0_22 = arith.constant 0 : index
      %51 = memref.load %arg7[%c0_21, %c0_22] : memref<1x1xf32, #tpu.memory_space<smem>>
      %52 = vector.broadcast %51 : f32 to vector<2xf32>
      %53 = arith.addf %50, %52 : vector<2xf32>
      %54 = vector.shape_cast %53 : vector<2xf32> to vector<1x2xf32>
      %c0_23 = arith.constant 0 : index
      %c0_24 = arith.constant 0 : index
      %55 = vector.load %arg8[%c0_23, %c0_24] : memref<1x2xf32, #tpu.memory_space<vmem>>, vector<1x2xf32>
      tpu.vector_store %arg8[%c0_23, %c0_24], %54 {strides = array<i32>} : memref<1x2xf32, #tpu.memory_space<vmem>>, vector<1x2xf32>,
    } else {
    }
    return
  }
  func.func @transform_0(%arg0: i32, %arg1: i32) -> (i32, i32, i32) {
    %c0_i32 = arith.constant 0 : i32
    %c0_i32_0 = arith.constant 0 : i32
    return %arg0, %arg1, %c0_i32 : i32, i32, i32
  }
  func.func @transform_1(%arg0: i32, %arg1: i32) -> (i32, i32) {
    %c0_i32 = arith.constant 0 : i32
    %c0_i32_0 = arith.constant 0 : i32
    %c0_i32_1 = arith.constant 0 : i32
    return %c0_i32, %c0_i32_0 : i32, i32
  }
  func.func @transform_2(%arg0: i32, %arg1: i32) -> (i32, i32) {
    %c0_i32 = arith.constant 0 : i32
    %c0_i32_0 = arith.constant 0 : i32
    %c0_i32_1 = arith.constant 0 : i32
    return %c0_i32, %c0_i32_0 : i32, i32
  }
  func.func @transform_3(%arg0: i32, %arg1: i32) -> (i32, i32) {
    %c0_i32 = arith.constant 0 : i32
    %c0_i32_0 = arith.constant 0 : i32
    %c0_i32_1 = arith.constant 0 : i32
    return %c0_i32, %c0_i32_0 : i32, i32
  }
  func.func @transform_4(%arg0: i32, %arg1: i32) -> (i32, i32) {
    %c0_i32 = arith.constant 0 : i32
    %c0_i32_0 = arith.constant 0 : i32
    return %arg0, %c0_i32 : i32, i32
  }
  func.func @transform_5(%arg0: i32, %arg1: i32) -> (i32, i32) {
    %c0_i32 = arith.constant 0 : i32
    %c0_i32_0 = arith.constant 0 : i32
    %c0_i32_1 = arith.constant 0 : i32
    return %c0_i32, %c0_i32_0 : i32, i32
  }
  func.func @transform_6(%arg0: i32, %arg1: i32) -> (i32, i32) {
    %c0_i32 = arith.constant 0 : i32
    %c0_i32_0 = arith.constant 0 : i32
    return %c0_i32, %arg0 : i32, i32
  }
}

</mosaic_0001>

<llo_original>
// kernel: tpu_custom_call.1
$region0: #{tpu_custom_call.1}
  #allocation0 [shape = 'u32[]', space=smem, size = 0x4, offset = 0x4, fixed_abs, tag = 'smem constant byte address 0x4 - core index']
  #allocation1 [shape = 'u32[144,128]{1,0:T(1,128)}', space=vmem, size = 0x12000, scoped, tag = 'internal scratch']
  #allocation2 [shape = 'f32[2,32]{1,0:T(2,128)}', space=vmem, size = 0x400, scoped, tag = 'scratch operand']
  #allocation3 [shape = 'f32[1,1]{1,0:T(1,128)S(6)}', space=smem, size = 0x200, scoped, tag = 'scoped memory for tpu_custom_call.1']
  %s0 = inlined_call_operand.vmem [shape: bf16[2,256,4], index: 0, kind: input, shape index: {}]
  %s1 = inlined_call_operand.vmem [shape: bf16[4,32], index: 1, kind: input, shape index: {}]
  %s2 = inlined_call_operand.vmem [shape: f32[1,32], index: 2, kind: input, shape index: {}]
  %s3 = inlined_call_operand.vmem [shape: f32[1,32], index: 3, kind: input, shape index: {}]
  %s4 = inlined_call_operand.vmem [shape: f32[2,32], index: 4, kind: input, shape index: {}]
  %s5 = inlined_call_operand.<no memory space> [shape: f32[1,1], index: 5, kind: input, shape index: {}]
  %s6 = inlined_call_operand.hbm [shape: f32[1,2], index: 6, kind: output, shape index: {}]
  %s7 = sld [smem:[#allocation0]]
  $region42: #{tpu_custom_call.1} parent=0
    _
  %s9 = ssub.s32 1, %s7
  %s10 = scalar_select 0, %s9, %s7
  %11 = sst [smem:[#allocation3]] %s5
  $region1: #{tpu_custom_call.1} parent=0
    #allocation4 [shape = 'u8[512]{0}', space=vmem, size = 0x400, scoped, tag = 'output window, operand 0, single buffered']
    #allocation5 [shape = 's32[1]{0}', space=sflag, size = 0x4, scoped, tag = 'scoped memory for tpu_custom_call.1']
    %12 = vsyncpa [#allocation5], 0
    // Predicated region
    $region2: #{tpu_custom_call.1} parent=1 // pred_check
      _
    $region3: #{tpu_custom_call.1} parent=1 // pred_check_branch
      %14 = sbr.rel (0) target = $region5
    $region4: #{tpu_custom_call.1} parent=1 // pred_region
      _
    $region5: #{tpu_custom_call.1} parent=1 // pred_fallthru
      _
    // Predicated region
    $region6: #{tpu_custom_call.1} parent=1 // pred_check
      _
    $region7: #{tpu_custom_call.1} parent=1 // pred_check_branch
      %16 = sbr.rel (0) target = $region9
    $region8: #{tpu_custom_call.1} parent=1 // pred_region
      _
    $region9: #{tpu_custom_call.1} parent=1 // pred_fallthru
      _
    // Predicated region
    $region10: #{tpu_custom_call.1} parent=1 // pred_check
      _
    $region11: #{tpu_custom_call.1} parent=1 // pred_check_branch
      %18 = sbr.rel (0) target = $region13
    $region12: #{tpu_custom_call.1} parent=1 // pred_region
      _
    $region13: #{tpu_custom_call.1} parent=1 // pred_fallthru
      _
    // Predicated region
    $region14: #{tpu_custom_call.1} parent=1 // pred_check
      _
    $region15: #{tpu_custom_call.1} parent=1 // pred_check_branch
      %20 = sbr.rel (0) target = $region17
    $region16: #{tpu_custom_call.1} parent=1 // pred_region
      _
    $region17: #{tpu_custom_call.1} parent=1 // pred_fallthru
      _
    // Predicated region
    $region18: #{tpu_custom_call.1} parent=1 // pred_check
      _
    $region19: #{tpu_custom_call.1} parent=1 // pred_check_branch
      %22 = sbr.rel (0) target = $region21
    $region20: #{tpu_custom_call.1} parent=1 // pred_region
      _
    $region21: #{tpu_custom_call.1} parent=1 // pred_fallthru
      _
    // Predicated region
    $region22: #{tpu_custom_call.1} parent=1 // pred_check
      _
    $region23: #{tpu_custom_call.1} parent=1 // pred_check_branch
      %24 = sbr.rel (0) target = $region25
    $region24: #{tpu_custom_call.1} parent=1 // pred_region
      _
    $region25: #{tpu_custom_call.1} parent=1 // pred_fallthru
      _
    %p25 = scmp.eq.s32.totalorder 0, 0
    // Predicated region
    $region26: #{tpu_custom_call.1} parent=1 // pred_check
      %p26 = pneg %p25
    $region27: #{tpu_custom_call.1} parent=1 // pred_check_branch
      %28 = sbr.rel (%p26) target = $region29
    $region28: #{tpu_custom_call.1} parent=1 // pred_region
      %vm29 = vcmask 254976
      %30 = vst.msk [vmem:[#allocation2] sm:$0x3] %vm29, 0.0
    $region29: #{tpu_custom_call.1} parent=1 // pred_fallthru
      _
    %v31 = vld [vmem:[%s0] sm:$0xf]
    %v32 = vld [vmem:[%s0 + $0x4] sm:$0xf]
    %v33 = vld [vmem:[%s0 + $0x8] sm:$0xf]
    %v34 = vld [vmem:[%s0 + $0xc] sm:$0xf]
    %v35 = vld [vmem:[%s0 + $0x10] sm:$0xf]
    %v36 = vld [vmem:[%s0 + $0x14] sm:$0xf]
    %v37 = vld [vmem:[%s0 + $0x18] sm:$0xf]
    %v38 = vld [vmem:[%s0 + $0x1c] sm:$0xf]
    %v39 = vld [vmem:[%s0 + $0x20] sm:$0xf]
    %v40 = vld [vmem:[%s0 + $0x24] sm:$0xf]
    %v41 = vld [vmem:[%s0 + $0x28] sm:$0xf]
    %v42 = vld [vmem:[%s0 + $0x2c] sm:$0xf]
    %v43 = vld [vmem:[%s0 + $0x30] sm:$0xf]
    %v44 = vld [vmem:[%s0 + $0x34] sm:$0xf]
    %v45 = vld [vmem:[%s0 + $0x38] sm:$0xf]
    %v46 = vld [vmem:[%s0 + $0x3c] sm:$0xf]
    %v47 = vld [vmem:[%s0 + $0x40] sm:$0xf]
    %v48 = vld [vmem:[%s0 + $0x44] sm:$0xf]
    %v49 = vld [vmem:[%s0 + $0x48] sm:$0xf]
    %v50 = vld [vmem:[%s0 + $0x4c] sm:$0xf]
    %v51 = vld [vmem:[%s0 + $0x50] sm:$0xf]
    %v52 = vld [vmem:[%s0 + $0x54] sm:$0xf]
    %v53 = vld [vmem:[%s0 + $0x58] sm:$0xf]
    %v54 = vld [vmem:[%s0 + $0x5c] sm:$0xf]
    %v55 = vld [vmem:[%s0 + $0x60] sm:$0xf]
    %v56 = vld [vmem:[%s0 + $0x64] sm:$0xf]
    %v57 = vld [vmem:[%s0 + $0x68] sm:$0xf]
    %v58 = vld [vmem:[%s0 + $0x6c] sm:$0xf]
    %v59 = vld [vmem:[%s0 + $0x70] sm:$0xf]
    %v60 = vld [vmem:[%s0 + $0x74] sm:$0xf]
    %v61 = vld [vmem:[%s0 + $0x78] sm:$0xf]
    %v62 = vld [vmem:[%s0 + $0x7c] sm:$0xf]
    %v63 = vld [vmem:[%s0 + $0x80] sm:$0xf]
    %v64 = vld [vmem:[%s0 + $0x84] sm:$0xf]
    %v65 = vld [vmem:[%s0 + $0x88] sm:$0xf]
    %v66 = vld [vmem:[%s0 + $0x8c] sm:$0xf]
    %v67 = vld [vmem:[%s0 + $0x90] sm:$0xf]
    %v68 = vld [vmem:[%s0 + $0x94] sm:$0xf]
    %v69 = vld [vmem:[%s0 + $0x98] sm:$0xf]
    %v70 = vld [vmem:[%s0 + $0x9c] sm:$0xf]
    %v71 = vld [vmem:[%s0 + $0xa0] sm:$0xf]
    %v72 = vld [vmem:[%s0 + $0xa4] sm:$0xf]
    %v73 = vld [vmem:[%s0 + $0xa8] sm:$0xf]
    %v74 = vld [vmem:[%s0 + $0xac] sm:$0xf]
    %v75 = vld [vmem:[%s0 + $0xb0] sm:$0xf]
    %v76 = vld [vmem:[%s0 + $0xb4] sm:$0xf]
    %v77 = vld [vmem:[%s0 + $0xb8] sm:$0xf]
    %v78 = vld [vmem:[%s0 + $0xbc] sm:$0xf]
    %v79 = vld [vmem:[%s0 + $0xc0] sm:$0xf]
    %v80 = vld [vmem:[%s0 + $0xc4] sm:$0xf]
    %v81 = vld [vmem:[%s0 + $0xc8] sm:$0xf]
    %v82 = vld [vmem:[%s0 + $0xcc] sm:$0xf]
    %v83 = vld [vmem:[%s0 + $0xd0] sm:$0xf]
    %v84 = vld [vmem:[%s0 + $0xd4] sm:$0xf]
    %v85 = vld [vmem:[%s0 + $0xd8] sm:$0xf]
    %v86 = vld [vmem:[%s0 + $0xdc] sm:$0xf]
    %v87 = vld [vmem:[%s0 + $0xe0] sm:$0xf]
    %v88 = vld [vmem:[%s0 + $0xe4] sm:$0xf]
    %v89 = vld [vmem:[%s0 + $0xe8] sm:$0xf]
    %v90 = vld [vmem:[%s0 + $0xec] sm:$0xf]
    %v91 = vld [vmem:[%s0 + $0xf0] sm:$0xf]
    %v92 = vld [vmem:[%s0 + $0xf4] sm:$0xf]
    %v93 = vld [vmem:[%s0 + $0xf8] sm:$0xf]
    %v94 = vld [vmem:[%s0 + $0xfc] sm:$0xf]
    %v95 = vunpack.c.l.bf16 %v31
    %v96 = vunpack.c.l.bf16 %v32
    %v97 = vunpack.c.l.bf16 %v33
    %v98 = vunpack.c.l.bf16 %v34
    %v99 = vunpack.c.l.bf16 %v35
    %v100 = vunpack.c.l.bf16 %v36
    %v101 = vunpack.c.l.bf16 %v37
    %v102 = vunpack.c.l.bf16 %v38
    %v103 = vunpack.c.l.bf16 %v39
    %v104 = vunpack.c.l.bf16 %v40
    %v105 = vunpack.c.l.bf16 %v41
    %v106 = vunpack.c.l.bf16 %v42
    %v107 = vunpack.c.l.bf16 %v43
    %v108 = vunpack.c.l.bf16 %v44
    %v109 = vunpack.c.l.bf16 %v45
    %v110 = vunpack.c.l.bf16 %v46
    %v111 = vunpack.c.l.bf16 %v47
    %v112 = vunpack.c.l.bf16 %v48
    %v113 = vunpack.c.l.bf16 %v49
    %v114 = vunpack.c.l.bf16 %v50
    %v115 = vunpack.c.l.bf16 %v51
    %v116 = vunpack.c.l.bf16 %v52
    %v117 = vunpack.c.l.bf16 %v53
    %v118 = vunpack.c.l.bf16 %v54
    %v119 = vunpack.c.l.bf16 %v55
    %v120 = vunpack.c.l.bf16 %v56
    %v121 = vunpack.c.l.bf16 %v57
    %v122 = vunpack.c.l.bf16 %v58
    %v123 = vunpack.c.l.bf16 %v59
    %v124 = vunpack.c.l.bf16 %v60
    %v125 = vunpack.c.l.bf16 %v61
    %v126 = vunpack.c.l.bf16 %v62
    %v127 = vunpack.c.l.bf16 %v63
    %v128 = vunpack.c.l.bf16 %v64
    %v129 = vunpack.c.l.bf16 %v65
    %v130 = vunpack.c.l.bf16 %v66
    %v131 = vunpack.c.l.bf16 %v67
    %v132 = vunpack.c.l.bf16 %v68
    %v133 = vunpack.c.l.bf16 %v69
    %v134 = vunpack.c.l.bf16 %v70
    %v135 = vunpack.c.l.bf16 %v71
    %v136 = vunpack.c.l.bf16 %v72
    %v137 = vunpack.c.l.bf16 %v73
    %v138 = vunpack.c.l.bf16 %v74
    %v139 = vunpack.c.l.bf16 %v75
    %v140 = vunpack.c.l.bf16 %v76
    %v141 = vunpack.c.l.bf16 %v77
    %v142 = vunpack.c.l.bf16 %v78
    %v143 = vunpack.c.l.bf16 %v79
    %v144 = vunpack.c.l.bf16 %v80
    %v145 = vunpack.c.l.bf16 %v81
    %v146 = vunpack.c.l.bf16 %v82
    %v147 = vunpack.c.l.bf16 %v83
    %v148 = vunpack.c.l.bf16 %v84
    %v149 = vunpack.c.l.bf16 %v85
    %v150 = vunpack.c.l.bf16 %v86
    %v151 = vunpack.c.l.bf16 %v87
    %v152 = vunpack.c.l.bf16 %v88
    %v153 = vunpack.c.l.bf16 %v89
    %v154 = vunpack.c.l.bf16 %v90
    %v155 = vunpack.c.l.bf16 %v91
    %v156 = vunpack.c.l.bf16 %v92
    %v157 = vunpack.c.l.bf16 %v93
    %v158 = vunpack.c.l.bf16 %v94
    %v159 = vld [vmem:[%s1] sm:$0x3]
    %v160 = vunpack.c.l.bf16 %v159
    %162 = vset.pattern.permute.xlu0 0
    %163 = vperm.xlu0 %162, %v95
    %v164 = vpop.permute.xlu0 %163
    %167 = vset.pattern.permute.xlu0 0
    %168 = vperm.xlu0 %167, %v96
    %v169 = vpop.permute.xlu0 %168
    %172 = vset.pattern.permute.xlu0 0
    %173 = vperm.xlu0 %172, %v97
    %v174 = vpop.permute.xlu0 %173
    %177 = vset.pattern.permute.xlu0 0
    %178 = vperm.xlu0 %177, %v98
    %v179 = vpop.permute.xlu0 %178
    %182 = vset.pattern.permute.xlu0 0
    %183 = vperm.xlu0 %182, %v99
    %v184 = vpop.permute.xlu0 %183
    %187 = vset.pattern.permute.xlu0 0
    %188 = vperm.xlu0 %187, %v100
    %v189 = vpop.permute.xlu0 %188
    %192 = vset.pattern.permute.xlu0 0
    %193 = vperm.xlu0 %192, %v101
    %v194 = vpop.permute.xlu0 %193
    %197 = vset.pattern.permute.xlu0 0
    %198 = vperm.xlu0 %197, %v102
    %v199 = vpop.permute.xlu0 %198
    %202 = vset.pattern.permute.xlu0 0
    %203 = vperm.xlu0 %202, %v103
    %v204 = vpop.permute.xlu0 %203
    %207 = vset.pattern.permute.xlu0 0
    %208 = vperm.xlu0 %207, %v104
    %v209 = vpop.permute.xlu0 %208
    %212 = vset.pattern.permute.xlu0 0
    %213 = vperm.xlu0 %212, %v105
    %v214 = vpop.permute.xlu0 %213
    %217 = vset.pattern.permute.xlu0 0
    %218 = vperm.xlu0 %217, %v106
    %v219 = vpop.permute.xlu0 %218
    %222 = vset.pattern.permute.xlu0 0
    %223 = vperm.xlu0 %222, %v107
    %v224 = vpop.permute.xlu0 %223
    %227 = vset.pattern.permute.xlu0 0
    %228 = vperm.xlu0 %227, %v108
    %v229 = vpop.permute.xlu0 %228
    %232 = vset.pattern.permute.xlu0 0
    %233 = vperm.xlu0 %232, %v109
    %v234 = vpop.permute.xlu0 %233
    %237 = vset.pattern.permute.xlu0 0
    %238 = vperm.xlu0 %237, %v110
    %v239 = vpop.permute.xlu0 %238
    %242 = vset.pattern.permute.xlu0 0
    %243 = vperm.xlu0 %242, %v111
    %v244 = vpop.permute.xlu0 %243
    %247 = vset.pattern.permute.xlu0 0
    %248 = vperm.xlu0 %247, %v112
    %v249 = vpop.permute.xlu0 %248
    %252 = vset.pattern.permute.xlu0 0
    %253 = vperm.xlu0 %252, %v113
    %v254 = vpop.permute.xlu0 %253
    %257 = vset.pattern.permute.xlu0 0
    %258 = vperm.xlu0 %257, %v114
    %v259 = vpop.permute.xlu0 %258
    %262 = vset.pattern.permute.xlu0 0
    %263 = vperm.xlu0 %262, %v115
    %v264 = vpop.permute.xlu0 %263
    %267 = vset.pattern.permute.xlu0 0
    %268 = vperm.xlu0 %267, %v116
    %v269 = vpop.permute.xlu0 %268
    %272 = vset.pattern.permute.xlu0 0
    %273 = vperm.xlu0 %272, %v117
    %v274 = vpop.permute.xlu0 %273
    %277 = vset.pattern.permute.xlu0 0
    %278 = vperm.xlu0 %277, %v118
    %v279 = vpop.permute.xlu0 %278
    %282 = vset.pattern.permute.xlu0 0
    %283 = vperm.xlu0 %282, %v119
    %v284 = vpop.permute.xlu0 %283
    %287 = vset.pattern.permute.xlu0 0
    %288 = vperm.xlu0 %287, %v120
    %v289 = vpop.permute.xlu0 %288
    %292 = vset.pattern.permute.xlu0 0
    %293 = vperm.xlu0 %292, %v121
    %v294 = vpop.permute.xlu0 %293
    %297 = vset.pattern.permute.xlu0 0
    %298 = vperm.xlu0 %297, %v122
    %v299 = vpop.permute.xlu0 %298
    %302 = vset.pattern.permute.xlu0 0
    %303 = vperm.xlu0 %302, %v123
    %v304 = vpop.permute.xlu0 %303
    %307 = vset.pattern.permute.xlu0 0
    %308 = vperm.xlu0 %307, %v124
    %v309 = vpop.permute.xlu0 %308
    %312 = vset.pattern.permute.xlu0 0
    %313 = vperm.xlu0 %312, %v125
    %v314 = vpop.permute.xlu0 %313
    %317 = vset.pattern.permute.xlu0 0
    %318 = vperm.xlu0 %317, %v126
    %v319 = vpop.permute.xlu0 %318
    %322 = vset.pattern.permute.xlu0 0
    %323 = vperm.xlu0 %322, %v127
    %v324 = vpop.permute.xlu0 %323
    %327 = vset.pattern.permute.xlu0 0
    %328 = vperm.xlu0 %327, %v128
    %v329 = vpop.permute.xlu0 %328
    %332 = vset.pattern.permute.xlu0 0
    %333 = vperm.xlu0 %332, %v129
    %v334 = vpop.permute.xlu0 %333
    %337 = vset.pattern.permute.xlu0 0
    %338 = vperm.xlu0 %337, %v130
    %v339 = vpop.permute.xlu0 %338
    %342 = vset.pattern.permute.xlu0 0
    %343 = vperm.xlu0 %342, %v131
    %v344 = vpop.permute.xlu0 %343
    %347 = vset.pattern.permute.xlu0 0
    %348 = vperm.xlu0 %347, %v132
    %v349 = vpop.permute.xlu0 %348
    %352 = vset.pattern.permute.xlu0 0
    %353 = vperm.xlu0 %352, %v133
    %v354 = vpop.permute.xlu0 %353
    %357 = vset.pattern.permute.xlu0 0
    %358 = vperm.xlu0 %357, %v134
    %v359 = vpop.permute.xlu0 %358
    %362 = vset.pattern.permute.xlu0 0
    %363 = vperm.xlu0 %362, %v135
    %v364 = vpop.permute.xlu0 %363
    %367 = vset.pattern.permute.xlu0 0
    %368 = vperm.xlu0 %367, %v136
    %v369 = vpop.permute.xlu0 %368
    %372 = vset.pattern.permute.xlu0 0
    %373 = vperm.xlu0 %372, %v137
    %v374 = vpop.permute.xlu0 %373
    %377 = vset.pattern.permute.xlu0 0
    %378 = vperm.xlu0 %377, %v138
    %v379 = vpop.permute.xlu0 %378
    %382 = vset.pattern.permute.xlu0 0
    %383 = vperm.xlu0 %382, %v139
    %v384 = vpop.permute.xlu0 %383
    %387 = vset.pattern.permute.xlu0 0
    %388 = vperm.xlu0 %387, %v140
    %v389 = vpop.permute.xlu0 %388
    %392 = vset.pattern.permute.xlu0 0
    %393 = vperm.xlu0 %392, %v141
    %v394 = vpop.permute.xlu0 %393
    %397 = vset.pattern.permute.xlu0 0
    %398 = vperm.xlu0 %397, %v142
    %v399 = vpop.permute.xlu0 %398
    %402 = vset.pattern.permute.xlu0 0
    %403 = vperm.xlu0 %402, %v143
    %v404 = vpop.permute.xlu0 %403
    %407 = vset.pattern.permute.xlu0 0
    %408 = vperm.xlu0 %407, %v144
    %v409 = vpop.permute.xlu0 %408
    %412 = vset.pattern.permute.xlu0 0
    %413 = vperm.xlu0 %412, %v145
    %v414 = vpop.permute.xlu0 %413
    %417 = vset.pattern.permute.xlu0 0
    %418 = vperm.xlu0 %417, %v146
    %v419 = vpop.permute.xlu0 %418
    %422 = vset.pattern.permute.xlu0 0
    %423 = vperm.xlu0 %422, %v147
    %v424 = vpop.permute.xlu0 %423
    %427 = vset.pattern.permute.xlu0 0
    %428 = vperm.xlu0 %427, %v148
    %v429 = vpop.permute.xlu0 %428
    %432 = vset.pattern.permute.xlu0 0
    %433 = vperm.xlu0 %432, %v149
    %v434 = vpop.permute.xlu0 %433
    %437 = vset.pattern.permute.xlu0 0
    %438 = vperm.xlu0 %437, %v150
    %v439 = vpop.permute.xlu0 %438
    %442 = vset.pattern.permute.xlu0 0
    %443 = vperm.xlu0 %442, %v151
    %v444 = vpop.permute.xlu0 %443
    %447 = vset.pattern.permute.xlu0 0
    %448 = vperm.xlu0 %447, %v152
    %v449 = vpop.permute.xlu0 %448
    %452 = vset.pattern.permute.xlu0 0
    %453 = vperm.xlu0 %452, %v153
    %v454 = vpop.permute.xlu0 %453
    %457 = vset.pattern.permute.xlu0 0
    %458 = vperm.xlu0 %457, %v154
    %v459 = vpop.permute.xlu0 %458
    %462 = vset.pattern.permute.xlu0 0
    %463 = vperm.xlu0 %462, %v155
    %v464 = vpop.permute.xlu0 %463
    %467 = vset.pattern.permute.xlu0 0
    %468 = vperm.xlu0 %467, %v156
    %v469 = vpop.permute.xlu0 %468
    %472 = vset.pattern.permute.xlu0 0
    %473 = vperm.xlu0 %472, %v157
    %v474 = vpop.permute.xlu0 %473
    %477 = vset.pattern.permute.xlu0 0
    %478 = vperm.xlu0 %477, %v158
    %v479 = vpop.permute.xlu0 %478
    %v481 = vlaneseq
    %v482 = vshrl.u32 %v481, 7
    %v483 = vsub.s32 0, %v482
    %v484 = vrot.slane %v160, %v483
    %v485 = vmul.f32 %v164, %v484
    %v486 = vmul.f32 %v169, %v484
    %v487 = vmul.f32 %v174, %v484
    %v488 = vmul.f32 %v179, %v484
    %v489 = vmul.f32 %v184, %v484
    %v490 = vmul.f32 %v189, %v484
    %v491 = vmul.f32 %v194, %v484
    %v492 = vmul.f32 %v199, %v484
    %v493 = vmul.f32 %v204, %v484
    %v494 = vmul.f32 %v209, %v484
    %v495 = vmul.f32 %v214, %v484
    %v496 = vmul.f32 %v219, %v484
    %v497 = vmul.f32 %v224, %v484
    %v498 = vmul.f32 %v229, %v484
    %v499 = vmul.f32 %v234, %v484
    %v500 = vmul.f32 %v239, %v484
    %v501 = vmul.f32 %v244, %v484
    %v502 = vmul.f32 %v249, %v484
    %v503 = vmul.f32 %v254, %v484
    %v504 = vmul.f32 %v259, %v484
    %v505 = vmul.f32 %v264, %v484
    %v506 = vmul.f32 %v269, %v484
    %v507 = vmul.f32 %v274, %v484
    %v508 = vmul.f32 %v279, %v484
    %v509 = vmul.f32 %v284, %v484
    %v510 = vmul.f32 %v289, %v484
    %v511 = vmul.f32 %v294, %v484
    %v512 = vmul.f32 %v299, %v484
    %v513 = vmul.f32 %v304, %v484
    %v514 = vmul.f32 %v309, %v484
    %v515 = vmul.f32 %v314, %v484
    %v516 = vmul.f32 %v319, %v484
    %v517 = vmul.f32 %v324, %v484
    %v518 = vmul.f32 %v329, %v484
    %v519 = vmul.f32 %v334, %v484
    %v520 = vmul.f32 %v339, %v484
    %v521 = vmul.f32 %v344, %v484
    %v522 = vmul.f32 %v349, %v484
    %v523 = vmul.f32 %v354, %v484
    %v524 = vmul.f32 %v359, %v484
    %v525 = vmul.f32 %v364, %v484
    %v526 = vmul.f32 %v369, %v484
    %v527 = vmul.f32 %v374, %v484
    %v528 = vmul.f32 %v379, %v484
    %v529 = vmul.f32 %v384, %v484
    %v530 = vmul.f32 %v389, %v484
    %v531 = vmul.f32 %v394, %v484
    %v532 = vmul.f32 %v399, %v484
    %v533 = vmul.f32 %v404, %v484
    %v534 = vmul.f32 %v409, %v484
    %v535 = vmul.f32 %v414, %v484
    %v536 = vmul.f32 %v419, %v484
    %v537 = vmul.f32 %v424, %v484
    %v538 = vmul.f32 %v429, %v484
    %v539 = vmul.f32 %v434, %v484
    %v540 = vmul.f32 %v439, %v484
    %v541 = vmul.f32 %v444, %v484
    %v542 = vmul.f32 %v449, %v484
    %v543 = vmul.f32 %v454, %v484
    %v544 = vmul.f32 %v459, %v484
    %v545 = vmul.f32 %v464, %v484
    %v546 = vmul.f32 %v469, %v484
    %v547 = vmul.f32 %v474, %v484
    %v548 = vmul.f32 %v479, %v484
    %549 = vset.pattern.permute.xlu0 1
    %550 = vperm.xlu0 %549, %v95
    %v551 = vpop.permute.xlu0 %550
    %553 = vset.pattern.permute.xlu0 1
    %554 = vperm.xlu0 %553, %v96
    %v555 = vpop.permute.xlu0 %554
    %557 = vset.pattern.permute.xlu0 1
    %558 = vperm.xlu0 %557, %v97
    %v559 = vpop.permute.xlu0 %558
    %561 = vset.pattern.permute.xlu0 1
    %562 = vperm.xlu0 %561, %v98
    %v563 = vpop.permute.xlu0 %562
    %565 = vset.pattern.permute.xlu0 1
    %566 = vperm.xlu0 %565, %v99
    %v567 = vpop.permute.xlu0 %566
    %569 = vset.pattern.permute.xlu0 1
    %570 = vperm.xlu0 %569, %v100
    %v571 = vpop.permute.xlu0 %570
    %573 = vset.pattern.permute.xlu0 1
    %574 = vperm.xlu0 %573, %v101
    %v575 = vpop.permute.xlu0 %574
    %577 = vset.pattern.permute.xlu0 1
    %578 = vperm.xlu0 %577, %v102
    %v579 = vpop.permute.xlu0 %578
    %581 = vset.pattern.permute.xlu0 1
    %582 = vperm.xlu0 %581, %v103
    %v583 = vpop.permute.xlu0 %582
    %585 = vset.pattern.permute.xlu0 1
    %586 = vperm.xlu0 %585, %v104
    %v587 = vpop.permute.xlu0 %586
    %589 = vset.pattern.permute.xlu0 1
    %590 = vperm.xlu0 %589, %v105
    %v591 = vpop.permute.xlu0 %590
    %593 = vset.pattern.permute.xlu0 1
    %594 = vperm.xlu0 %593, %v106
    %v595 = vpop.permute.xlu0 %594
    %597 = vset.pattern.permute.xlu0 1
    %598 = vperm.xlu0 %597, %v107
    %v599 = vpop.permute.xlu0 %598
    %601 = vset.pattern.permute.xlu0 1
    %602 = vperm.xlu0 %601, %v108
    %v603 = vpop.permute.xlu0 %602
    %605 = vset.pattern.permute.xlu0 1
    %606 = vperm.xlu0 %605, %v109
    %v607 = vpop.permute.xlu0 %606
    %609 = vset.pattern.permute.xlu0 1
    %610 = vperm.xlu0 %609, %v110
    %v611 = vpop.permute.xlu0 %610
    %613 = vset.pattern.permute.xlu0 1
    %614 = vperm.xlu0 %613, %v111
    %v615 = vpop.permute.xlu0 %614
    %617 = vset.pattern.permute.xlu0 1
    %618 = vperm.xlu0 %617, %v112
    %v619 = vpop.permute.xlu0 %618
    %621 = vset.pattern.permute.xlu0 1
    %622 = vperm.xlu0 %621, %v113
    %v623 = vpop.permute.xlu0 %622
    %625 = vset.pattern.permute.xlu0 1
    %626 = vperm.xlu0 %625, %v114
    %v627 = vpop.permute.xlu0 %626
    %629 = vset.pattern.permute.xlu0 1
    %630 = vperm.xlu0 %629, %v115
    %v631 = vpop.permute.xlu0 %630
    %633 = vset.pattern.permute.xlu0 1
    %634 = vperm.xlu0 %633, %v116
    %v635 = vpop.permute.xlu0 %634
    %637 = vset.pattern.permute.xlu0 1
    %638 = vperm.xlu0 %637, %v117
    %v639 = vpop.permute.xlu0 %638
    %641 = vset.pattern.permute.xlu0 1
    %642 = vperm.xlu0 %641, %v118
    %v643 = vpop.permute.xlu0 %642
    %645 = vset.pattern.permute.xlu0 1
    %646 = vperm.xlu0 %645, %v119
    %v647 = vpop.permute.xlu0 %646
    %649 = vset.pattern.permute.xlu0 1
    %650 = vperm.xlu0 %649, %v120
    %v651 = vpop.permute.xlu0 %650
    %653 = vset.pattern.permute.xlu0 1
    %654 = vperm.xlu0 %653, %v121
    %v655 = vpop.permute.xlu0 %654
    %657 = vset.pattern.permute.xlu0 1
    %658 = vperm.xlu0 %657, %v122
    %v659 = vpop.permute.xlu0 %658
    %661 = vset.pattern.permute.xlu0 1
    %662 = vperm.xlu0 %661, %v123
    %v663 = vpop.permute.xlu0 %662
    %665 = vset.pattern.permute.xlu0 1
    %666 = vperm.xlu0 %665, %v124
    %v667 = vpop.permute.xlu0 %666
    %669 = vset.pattern.permute.xlu0 1
    %670 = vperm.xlu0 %669, %v125
    %v671 = vpop.permute.xlu0 %670
    %673 = vset.pattern.permute.xlu0 1
    %674 = vperm.xlu0 %673, %v126
    %v675 = vpop.permute.xlu0 %674
    %677 = vset.pattern.permute.xlu0 1
    %678 = vperm.xlu0 %677, %v127
    %v679 = vpop.permute.xlu0 %678
    %681 = vset.pattern.permute.xlu0 1
    %682 = vperm.xlu0 %681, %v128
    %v683 = vpop.permute.xlu0 %682
    %685 = vset.pattern.permute.xlu0 1
    %686 = vperm.xlu0 %685, %v129
    %v687 = vpop.permute.xlu0 %686
    %689 = vset.pattern.permute.xlu0 1
    %690 = vperm.xlu0 %689, %v130
    %v691 = vpop.permute.xlu0 %690
    %693 = vset.pattern.permute.xlu0 1
    %694 = vperm.xlu0 %693, %v131
    %v695 = vpop.permute.xlu0 %694
    %697 = vset.pattern.permute.xlu0 1
    %698 = vperm.xlu0 %697, %v132
    %v699 = vpop.permute.xlu0 %698
    %701 = vset.pattern.permute.xlu0 1
    %702 = vperm.xlu0 %701, %v133
    %v703 = vpop.permute.xlu0 %702
    %705 = vset.pattern.permute.xlu0 1
    %706 = vperm.xlu0 %705, %v134
    %v707 = vpop.permute.xlu0 %706
    %709 = vset.pattern.permute.xlu0 1
    %710 = vperm.xlu0 %709, %v135
    %v711 = vpop.permute.xlu0 %710
    %713 = vset.pattern.permute.xlu0 1
    %714 = vperm.xlu0 %713, %v136
    %v715 = vpop.permute.xlu0 %714
    %717 = vset.pattern.permute.xlu0 1
    %718 = vperm.xlu0 %717, %v137
    %v719 = vpop.permute.xlu0 %718
    %721 = vset.pattern.permute.xlu0 1
    %722 = vperm.xlu0 %721, %v138
    %v723 = vpop.permute.xlu0 %722
    %725 = vset.pattern.permute.xlu0 1
    %726 = vperm.xlu0 %725, %v139
    %v727 = vpop.permute.xlu0 %726
    %729 = vset.pattern.permute.xlu0 1
    %730 = vperm.xlu0 %729, %v140
    %v731 = vpop.permute.xlu0 %730
    %733 = vset.pattern.permute.xlu0 1
    %734 = vperm.xlu0 %733, %v141
    %v735 = vpop.permute.xlu0 %734
    %737 = vset.pattern.permute.xlu0 1
    %738 = vperm.xlu0 %737, %v142
    %v739 = vpop.permute.xlu0 %738
    %741 = vset.pattern.permute.xlu0 1
    %742 = vperm.xlu0 %741, %v143
    %v743 = vpop.permute.xlu0 %742
    %745 = vset.pattern.permute.xlu0 1
    %746 = vperm.xlu0 %745, %v144
    %v747 = vpop.permute.xlu0 %746
    %749 = vset.pattern.permute.xlu0 1
    %750 = vperm.xlu0 %749, %v145
    %v751 = vpop.permute.xlu0 %750
    %753 = vset.pattern.permute.xlu0 1
    %754 = vperm.xlu0 %753, %v146
    %v755 = vpop.permute.xlu0 %754
    %757 = vset.pattern.permute.xlu0 1
    %758 = vperm.xlu0 %757, %v147
    %v759 = vpop.permute.xlu0 %758
    %761 = vset.pattern.permute.xlu0 1
    %762 = vperm.xlu0 %761, %v148
    %v763 = vpop.permute.xlu0 %762
    %765 = vset.pattern.permute.xlu0 1
    %766 = vperm.xlu0 %765, %v149
    %v767 = vpop.permute.xlu0 %766
    %769 = vset.pattern.permute.xlu0 1
    %770 = vperm.xlu0 %769, %v150
    %v771 = vpop.permute.xlu0 %770
    %773 = vset.pattern.permute.xlu0 1
    %774 = vperm.xlu0 %773, %v151
    %v775 = vpop.permute.xlu0 %774
    %777 = vset.pattern.permute.xlu0 1
    %778 = vperm.xlu0 %777, %v152
    %v779 = vpop.permute.xlu0 %778
    %781 = vset.pattern.permute.xlu0 1
    %782 = vperm.xlu0 %781, %v153
    %v783 = vpop.permute.xlu0 %782
    %785 = vset.pattern.permute.xlu0 1
    %786 = vperm.xlu0 %785, %v154
    %v787 = vpop.permute.xlu0 %786
    %789 = vset.pattern.permute.xlu0 1
    %790 = vperm.xlu0 %789, %v155
    %v791 = vpop.permute.xlu0 %790
    %793 = vset.pattern.permute.xlu0 1
    %794 = vperm.xlu0 %793, %v156
    %v795 = vpop.permute.xlu0 %794
    %797 = vset.pattern.permute.xlu0 1
    %798 = vperm.xlu0 %797, %v157
    %v799 = vpop.permute.xlu0 %798
    %801 = vset.pattern.permute.xlu0 1
    %802 = vperm.xlu0 %801, %v158
    %v803 = vpop.permute.xlu0 %802
    %v805 = vlaneseq
    %v806 = vshrl.u32 %v805, 7
    %v807 = vsub.s32 1, %v806
    %v808 = vrot.slane %v160, %v807
    %v809 = vmul.f32 %v551, %v808
    %v810 = vmul.f32 %v555, %v808
    %v811 = vmul.f32 %v559, %v808
    %v812 = vmul.f32 %v563, %v808
    %v813 = vmul.f32 %v567, %v808
    %v814 = vmul.f32 %v571, %v808
    %v815 = vmul.f32 %v575, %v808
    %v816 = vmul.f32 %v579, %v808
    %v817 = vmul.f32 %v583, %v808
    %v818 = vmul.f32 %v587, %v808
    %v819 = vmul.f32 %v591, %v808
    %v820 = vmul.f32 %v595, %v808
    %v821 = vmul.f32 %v599, %v808
    %v822 = vmul.f32 %v603, %v808
    %v823 = vmul.f32 %v607, %v808
    %v824 = vmul.f32 %v611, %v808
    %v825 = vmul.f32 %v615, %v808
    %v826 = vmul.f32 %v619, %v808
    %v827 = vmul.f32 %v623, %v808
    %v828 = vmul.f32 %v627, %v808
    %v829 = vmul.f32 %v631, %v808
    %v830 = vmul.f32 %v635, %v808
    %v831 = vmul.f32 %v639, %v808
    %v832 = vmul.f32 %v643, %v808
    %v833 = vmul.f32 %v647, %v808
    %v834 = vmul.f32 %v651, %v808
    %v835 = vmul.f32 %v655, %v808
    %v836 = vmul.f32 %v659, %v808
    %v837 = vmul.f32 %v663, %v808
    %v838 = vmul.f32 %v667, %v808
    %v839 = vmul.f32 %v671, %v808
    %v840 = vmul.f32 %v675, %v808
    %v841 = vmul.f32 %v679, %v808
    %v842 = vmul.f32 %v683, %v808
    %v843 = vmul.f32 %v687, %v808
    %v844 = vmul.f32 %v691, %v808
    %v845 = vmul.f32 %v695, %v808
    %v846 = vmul.f32 %v699, %v808
    %v847 = vmul.f32 %v703, %v808
    %v848 = vmul.f32 %v707, %v808
    %v849 = vmul.f32 %v711, %v808
    %v850 = vmul.f32 %v715, %v808
    %v851 = vmul.f32 %v719, %v808
    %v852 = vmul.f32 %v723, %v808
    %v853 = vmul.f32 %v727, %v808
    %v854 = vmul.f32 %v731, %v808
    %v855 = vmul.f32 %v735, %v808
    %v856 = vmul.f32 %v739, %v808
    %v857 = vmul.f32 %v743, %v808
    %v858 = vmul.f32 %v747, %v808
    %v859 = vmul.f32 %v751, %v808
    %v860 = vmul.f32 %v755, %v808
    %v861 = vmul.f32 %v759, %v808
    %v862 = vmul.f32 %v763, %v808
    %v863 = vmul.f32 %v767, %v808
    %v864 = vmul.f32 %v771, %v808
    %v865 = vmul.f32 %v775, %v808
    %v866 = vmul.f32 %v779, %v808
    %v867 = vmul.f32 %v783, %v808
    %v868 = vmul.f32 %v787, %v808
    %v869 = vmul.f32 %v791, %v808
    %v870 = vmul.f32 %v795, %v808
    %v871 = vmul.f32 %v799, %v808
    %v872 = vmul.f32 %v803, %v808
    %v873 = vadd.f32 %v485, %v809
    %v874 = vadd.f32 %v486, %v810
    %v875 = vadd.f32 %v487, %v811
    %v876 = vadd.f32 %v488, %v812
    %v877 = vadd.f32 %v489, %v813
    %v878 = vadd.f32 %v490, %v814
    %v879 = vadd.f32 %v491, %v815
    %v880 = vadd.f32 %v492, %v816
    %v881 = vadd.f32 %v493, %v817
    %v882 = vadd.f32 %v494, %v818
    %v883 = vadd.f32 %v495, %v819
    %v884 = vadd.f32 %v496, %v820
    %v885 = vadd.f32 %v497, %v821
    %v886 = vadd.f32 %v498, %v822
    %v887 = vadd.f32 %v499, %v823
    %v888 = vadd.f32 %v500, %v824
    %v889 = vadd.f32 %v501, %v825
    %v890 = vadd.f32 %v502, %v826
    %v891 = vadd.f32 %v503, %v827
    %v892 = vadd.f32 %v504, %v828
    %v893 = vadd.f32 %v505, %v829
    %v894 = vadd.f32 %v506, %v830
    %v895 = vadd.f32 %v507, %v831
    %v896 = vadd.f32 %v508, %v832
    %v897 = vadd.f32 %v509, %v833
    %v898 = vadd.f32 %v510, %v834
    %v899 = vadd.f32 %v511, %v835
    %v900 = vadd.f32 %v512, %v836
    %v901 = vadd.f32 %v513, %v837
    %v902 = vadd.f32 %v514, %v838
    %v903 = vadd.f32 %v515, %v839
    %v904 = vadd.f32 %v516, %v840
    %v905 = vadd.f32 %v517, %v841
    %v906 = vadd.f32 %v518, %v842
    %v907 = vadd.f32 %v519, %v843
    %v908 = vadd.f32 %v520, %v844
    %v909 = vadd.f32 %v521, %v845
    %v910 = vadd.f32 %v522, %v846
    %v911 = vadd.f32 %v523, %v847
    %v912 = vadd.f32 %v524, %v848
    %v913 = vadd.f32 %v525, %v849
    %v914 = vadd.f32 %v526, %v850
    %v915 = vadd.f32 %v527, %v851
    %v916 = vadd.f32 %v528, %v852
    %v917 = vadd.f32 %v529, %v853
    %v918 = vadd.f32 %v530, %v854
    %v919 = vadd.f32 %v531, %v855
    %v920 = vadd.f32 %v532, %v856
    %v921 = vadd.f32 %v533, %v857
    %v922 = vadd.f32 %v534, %v858
    %v923 = vadd.f32 %v535, %v859
    %v924 = vadd.f32 %v536, %v860
    %v925 = vadd.f32 %v537, %v861
    %v926 = vadd.f32 %v538, %v862
    %v927 = vadd.f32 %v539, %v863
    %v928 = vadd.f32 %v540, %v864
    %v929 = vadd.f32 %v541, %v865
    %v930 = vadd.f32 %v542, %v866
    %v931 = vadd.f32 %v543, %v867
    %v932 = vadd.f32 %v544, %v868
    %v933 = vadd.f32 %v545, %v869
    %v934 = vadd.f32 %v546, %v870
    %v935 = vadd.f32 %v547, %v871
    %v936 = vadd.f32 %v548, %v872
    %937 = vset.pattern.permute.xlu0 2
    %938 = vperm.xlu0 %937, %v95
    %v939 = vpop.permute.xlu0 %938
    %941 = vset.pattern.permute.xlu0 2
    %942 = vperm.xlu0 %941, %v96
    %v943 = vpop.permute.xlu0 %942
    %945 = vset.pattern.permute.xlu0 2
    %946 = vperm.xlu0 %945, %v97
    %v947 = vpop.permute.xlu0 %946
    %949 = vset.pattern.permute.xlu0 2
    %950 = vperm.xlu0 %949, %v98
    %v951 = vpop.permute.xlu0 %950
    %953 = vset.pattern.permute.xlu0 2
    %954 = vperm.xlu0 %953, %v99
    %v955 = vpop.permute.xlu0 %954
    %957 = vset.pattern.permute.xlu0 2
    %958 = vperm.xlu0 %957, %v100
    %v959 = vpop.permute.xlu0 %958
    %961 = vset.pattern.permute.xlu0 2
    %962 = vperm.xlu0 %961, %v101
    %v963 = vpop.permute.xlu0 %962
    %965 = vset.pattern.permute.xlu0 2
    %966 = vperm.xlu0 %965, %v102
    %v967 = vpop.permute.xlu0 %966
    %969 = vset.pattern.permute.xlu0 2
    %970 = vperm.xlu0 %969, %v103
    %v971 = vpop.permute.xlu0 %970
    %973 = vset.pattern.permute.xlu0 2
    %974 = vperm.xlu0 %973, %v104
    %v975 = vpop.permute.xlu0 %974
    %977 = vset.pattern.permute.xlu0 2
    %978 = vperm.xlu0 %977, %v105
    %v979 = vpop.permute.xlu0 %978
    %981 = vset.pattern.permute.xlu0 2
    %982 = vperm.xlu0 %981, %v106
    %v983 = vpop.permute.xlu0 %982
    %985 = vset.pattern.permute.xlu0 2
    %986 = vperm.xlu0 %985, %v107
    %v987 = vpop.permute.xlu0 %986
    %989 = vset.pattern.permute.xlu0 2
    %990 = vperm.xlu0 %989, %v108
    %v991 = vpop.permute.xlu0 %990
    %993 = vset.pattern.permute.xlu0 2
    %994 = vperm.xlu0 %993, %v109
    %v995 = vpop.permute.xlu0 %994
    %997 = vset.pattern.permute.xlu0 2
    %998 = vperm.xlu0 %997, %v110
    %v999 = vpop.permute.xlu0 %998
    %1001 = vset.pattern.permute.xlu0 2
    %1002 = vperm.xlu0 %1001, %v111
    %v1003 = vpop.permute.xlu0 %1002
    %1005 = vset.pattern.permute.xlu0 2
    %1006 = vperm.xlu0 %1005, %v112
    %v1007 = vpop.permute.xlu0 %1006
    %1009 = vset.pattern.permute.xlu0 2
    %1010 = vperm.xlu0 %1009, %v113
    %v1011 = vpop.permute.xlu0 %1010
    %1013 = vset.pattern.permute.xlu0 2
    %1014 = vperm.xlu0 %1013, %v114
    %v1015 = vpop.permute.xlu0 %1014
    %1017 = vset.pattern.permute.xlu0 2
    %1018 = vperm.xlu0 %1017, %v115
    %v1019 = vpop.permute.xlu0 %1018
    %1021 = vset.pattern.permute.xlu0 2
    %1022 = vperm.xlu0 %1021, %v116
    %v1023 = vpop.permute.xlu0 %1022
    %1025 = vset.pattern.permute.xlu0 2
    %1026 = vperm.xlu0 %1025, %v117
    %v1027 = vpop.permute.xlu0 %1026
    %1029 = vset.pattern.permute.xlu0 2
    %1030 = vperm.xlu0 %1029, %v118
    %v1031 = vpop.permute.xlu0 %1030
    %1033 = vset.pattern.permute.xlu0 2
    %1034 = vperm.xlu0 %1033, %v119
    %v1035 = vpop.permute.xlu0 %1034
    %1037 = vset.pattern.permute.xlu0 2
    %1038 = vperm.xlu0 %1037, %v120
    %v1039 = vpop.permute.xlu0 %1038
    %1041 = vset.pattern.permute.xlu0 2
    %1042 = vperm.xlu0 %1041, %v121
    %v1043 = vpop.permute.xlu0 %1042
    %1045 = vset.pattern.permute.xlu0 2
    %1046 = vperm.xlu0 %1045, %v122
    %v1047 = vpop.permute.xlu0 %1046
    %1049 = vset.pattern.permute.xlu0 2
    %1050 = vperm.xlu0 %1049, %v123
    %v1051 = vpop.permute.xlu0 %1050
    %1053 = vset.pattern.permute.xlu0 2
    %1054 = vperm.xlu0 %1053, %v124
    %v1055 = vpop.permute.xlu0 %1054
    %1057 = vset.pattern.permute.xlu0 2
    %1058 = vperm.xlu0 %1057, %v125
    %v1059 = vpop.permute.xlu0 %1058
    %1061 = vset.pattern.permute.xlu0 2
    %1062 = vperm.xlu0 %1061, %v126
    %v1063 = vpop.permute.xlu0 %1062
    %1065 = vset.pattern.permute.xlu0 2
    %1066 = vperm.xlu0 %1065, %v127
    %v1067 = vpop.permute.xlu0 %1066
    %1069 = vset.pattern.permute.xlu0 2
    %1070 = vperm.xlu0 %1069, %v128
    %v1071 = vpop.permute.xlu0 %1070
    %1073 = vset.pattern.permute.xlu0 2
    %1074 = vperm.xlu0 %1073, %v129
    %v1075 = vpop.permute.xlu0 %1074
    %1077 = vset.pattern.permute.xlu0 2
    %1078 = vperm.xlu0 %1077, %v130
    %v1079 = vpop.permute.xlu0 %1078
    %1081 = vset.pattern.permute.xlu0 2
    %1082 = vperm.xlu0 %1081, %v131
    %v1083 = vpop.permute.xlu0 %1082
    %1085 = vset.pattern.permute.xlu0 2
    %1086 = vperm.xlu0 %1085, %v132
    %v1087 = vpop.permute.xlu0 %1086
    %1089 = vset.pattern.permute.xlu0 2
    %1090 = vperm.xlu0 %1089, %v133
    %v1091 = vpop.permute.xlu0 %1090
    %1093 = vset.pattern.permute.xlu0 2
    %1094 = vperm.xlu0 %1093, %v134
    %v1095 = vpop.permute.xlu0 %1094
    %1097 = vset.pattern.permute.xlu0 2
    %1098 = vperm.xlu0 %1097, %v135
    %v1099 = vpop.permute.xlu0 %1098
    %1101 = vset.pattern.permute.xlu0 2
    %1102 = vperm.xlu0 %1101, %v136
    %v1103 = vpop.permute.xlu0 %1102
    %1105 = vset.pattern.permute.xlu0 2
    %1106 = vperm.xlu0 %1105, %v137
    %v1107 = vpop.permute.xlu0 %1106
    %1109 = vset.pattern.permute.xlu0 2
    %1110 = vperm.xlu0 %1109, %v138
    %v1111 = vpop.permute.xlu0 %1110
    %1113 = vset.pattern.permute.xlu0 2
    %1114 = vperm.xlu0 %1113, %v139
    %v1115 = vpop.permute.xlu0 %1114
    %1117 = vset.pattern.permute.xlu0 2
    %1118 = vperm.xlu0 %1117, %v140
    %v1119 = vpop.permute.xlu0 %1118
    %1121 = vset.pattern.permute.xlu0 2
    %1122 = vperm.xlu0 %1121, %v141
    %v1123 = vpop.permute.xlu0 %1122
    %1125 = vset.pattern.permute.xlu0 2
    %1126 = vperm.xlu0 %1125, %v142
    %v1127 = vpop.permute.xlu0 %1126
    %1129 = vset.pattern.permute.xlu0 2
    %1130 = vperm.xlu0 %1129, %v143
    %v1131 = vpop.permute.xlu0 %1130
    %1133 = vset.pattern.permute.xlu0 2
    %1134 = vperm.xlu0 %1133, %v144
    %v1135 = vpop.permute.xlu0 %1134
    %1137 = vset.pattern.permute.xlu0 2
    %1138 = vperm.xlu0 %1137, %v145
    %v1139 = vpop.permute.xlu0 %1138
    %1141 = vset.pattern.permute.xlu0 2
    %1142 = vperm.xlu0 %1141, %v146
    %v1143 = vpop.permute.xlu0 %1142
    %1145 = vset.pattern.permute.xlu0 2
    %1146 = vperm.xlu0 %1145, %v147
    %v1147 = vpop.permute.xlu0 %1146
    %1149 = vset.pattern.permute.xlu0 2
    %1150 = vperm.xlu0 %1149, %v148
    %v1151 = vpop.permute.xlu0 %1150
    %1153 = vset.pattern.permute.xlu0 2
    %1154 = vperm.xlu0 %1153, %v149
    %v1155 = vpop.permute.xlu0 %1154
    %1157 = vset.pattern.permute.xlu0 2
    %1158 = vperm.xlu0 %1157, %v150
    %v1159 = vpop.permute.xlu0 %1158
    %1161 = vset.pattern.permute.xlu0 2
    %1162 = vperm.xlu0 %1161, %v151
    %v1163 = vpop.permute.xlu0 %1162
    %1165 = vset.pattern.permute.xlu0 2
    %1166 = vperm.xlu0 %1165, %v152
    %v1167 = vpop.permute.xlu0 %1166
    %1169 = vset.pattern.permute.xlu0 2
    %1170 = vperm.xlu0 %1169, %v153
    %v1171 = vpop.permute.xlu0 %1170
    %1173 = vset.pattern.permute.xlu0 2
    %1174 = vperm.xlu0 %1173, %v154
    %v1175 = vpop.permute.xlu0 %1174
    %1177 = vset.pattern.permute.xlu0 2
    %1178 = vperm.xlu0 %1177, %v155
    %v1179 = vpop.permute.xlu0 %1178
    %1181 = vset.pattern.permute.xlu0 2
    %1182 = vperm.xlu0 %1181, %v156
    %v1183 = vpop.permute.xlu0 %1182
    %1185 = vset.pattern.permute.xlu0 2
    %1186 = vperm.xlu0 %1185, %v157
    %v1187 = vpop.permute.xlu0 %1186
    %1189 = vset.pattern.permute.xlu0 2
    %1190 = vperm.xlu0 %1189, %v158
    %v1191 = vpop.permute.xlu0 %1190
    %v1193 = vlaneseq
    %v1194 = vshrl.u32 %v1193, 7
    %v1195 = vsub.s32 2, %v1194
    %v1196 = vrot.slane %v160, %v1195
    %v1197 = vmul.f32 %v939, %v1196
    %v1198 = vmul.f32 %v943, %v1196
    %v1199 = vmul.f32 %v947, %v1196
    %v1200 = vmul.f32 %v951, %v1196
    %v1201 = vmul.f32 %v955, %v1196
    %v1202 = vmul.f32 %v959, %v1196
    %v1203 = vmul.f32 %v963, %v1196
    %v1204 = vmul.f32 %v967, %v1196
    %v1205 = vmul.f32 %v971, %v1196
    %v1206 = vmul.f32 %v975, %v1196
    %v1207 = vmul.f32 %v979, %v1196
    %v1208 = vmul.f32 %v983, %v1196
    %v1209 = vmul.f32 %v987, %v1196
    %v1210 = vmul.f32 %v991, %v1196
    %v1211 = vmul.f32 %v995, %v1196
    %v1212 = vmul.f32 %v999, %v1196
    %v1213 = vmul.f32 %v1003, %v1196
    %v1214 = vmul.f32 %v1007, %v1196
    %v1215 = vmul.f32 %v1011, %v1196
    %v1216 = vmul.f32 %v1015, %v1196
    %v1217 = vmul.f32 %v1019, %v1196
    %v1218 = vmul.f32 %v1023, %v1196
    %v1219 = vmul.f32 %v1027, %v1196
    %v1220 = vmul.f32 %v1031, %v1196
    %v1221 = vmul.f32 %v1035, %v1196
    %v1222 = vmul.f32 %v1039, %v1196
    %v1223 = vmul.f32 %v1043, %v1196
    %v1224 = vmul.f32 %v1047, %v1196
    %v1225 = vmul.f32 %v1051, %v1196
    %v1226 = vmul.f32 %v1055, %v1196
    %v1227 = vmul.f32 %v1059, %v1196
    %v1228 = vmul.f32 %v1063, %v1196
    %v1229 = vmul.f32 %v1067, %v1196
    %v1230 = vmul.f32 %v1071, %v1196
    %v1231 = vmul.f32 %v1075, %v1196
    %v1232 = vmul.f32 %v1079, %v1196
    %v1233 = vmul.f32 %v1083, %v1196
    %v1234 = vmul.f32 %v1087, %v1196
    %v1235 = vmul.f32 %v1091, %v1196
    %v1236 = vmul.f32 %v1095, %v1196
    %v1237 = vmul.f32 %v1099, %v1196
    %v1238 = vmul.f32 %v1103, %v1196
    %v1239 = vmul.f32 %v1107, %v1196
    %v1240 = vmul.f32 %v1111, %v1196
    %v1241 = vmul.f32 %v1115, %v1196
    %v1242 = vmul.f32 %v1119, %v1196
    %v1243 = vmul.f32 %v1123, %v1196
    %v1244 = vmul.f32 %v1127, %v1196
    %v1245 = vmul.f32 %v1131, %v1196
    %v1246 = vmul.f32 %v1135, %v1196
    %v1247 = vmul.f32 %v1139, %v1196
    %v1248 = vmul.f32 %v1143, %v1196
    %v1249 = vmul.f32 %v1147, %v1196
    %v1250 = vmul.f32 %v1151, %v1196
    %v1251 = vmul.f32 %v1155, %v1196
    %v1252 = vmul.f32 %v1159, %v1196
    %v1253 = vmul.f32 %v1163, %v1196
    %v1254 = vmul.f32 %v1167, %v1196
    %v1255 = vmul.f32 %v1171, %v1196
    %v1256 = vmul.f32 %v1175, %v1196
    %v1257 = vmul.f32 %v1179, %v1196
    %v1258 = vmul.f32 %v1183, %v1196
    %v1259 = vmul.f32 %v1187, %v1196
    %v1260 = vmul.f32 %v1191, %v1196
    %v1261 = vadd.f32 %v873, %v1197
    %v1262 = vadd.f32 %v874, %v1198
    %v1263 = vadd.f32 %v875, %v1199
    %v1264 = vadd.f32 %v876, %v1200
    %v1265 = vadd.f32 %v877, %v1201
    %v1266 = vadd.f32 %v878, %v1202
    %v1267 = vadd.f32 %v879, %v1203
    %v1268 = vadd.f32 %v880, %v1204
    %v1269 = vadd.f32 %v881, %v1205
    %v1270 = vadd.f32 %v882, %v1206
    %v1271 = vadd.f32 %v883, %v1207
    %v1272 = vadd.f32 %v884, %v1208
    %v1273 = vadd.f32 %v885, %v1209
    %v1274 = vadd.f32 %v886, %v1210
    %v1275 = vadd.f32 %v887, %v1211
    %v1276 = vadd.f32 %v888, %v1212
    %v1277 = vadd.f32 %v889, %v1213
    %v1278 = vadd.f32 %v890, %v1214
    %v1279 = vadd.f32 %v891, %v1215
    %v1280 = vadd.f32 %v892, %v1216
    %v1281 = vadd.f32 %v893, %v1217
    %v1282 = vadd.f32 %v894, %v1218
    %v1283 = vadd.f32 %v895, %v1219
    %v1284 = vadd.f32 %v896, %v1220
    %v1285 = vadd.f32 %v897, %v1221
    %v1286 = vadd.f32 %v898, %v1222
    %v1287 = vadd.f32 %v899, %v1223
    %v1288 = vadd.f32 %v900, %v1224
    %v1289 = vadd.f32 %v901, %v1225
    %v1290 = vadd.f32 %v902, %v1226
    %v1291 = vadd.f32 %v903, %v1227
    %v1292 = vadd.f32 %v904, %v1228
    %v1293 = vadd.f32 %v905, %v1229
    %v1294 = vadd.f32 %v906, %v1230
    %v1295 = vadd.f32 %v907, %v1231
    %v1296 = vadd.f32 %v908, %v1232
    %v1297 = vadd.f32 %v909, %v1233
    %v1298 = vadd.f32 %v910, %v1234
    %v1299 = vadd.f32 %v911, %v1235
    %v1300 = vadd.f32 %v912, %v1236
    %v1301 = vadd.f32 %v913, %v1237
    %v1302 = vadd.f32 %v914, %v1238
    %v1303 = vadd.f32 %v915, %v1239
    %v1304 = vadd.f32 %v916, %v1240
    %v1305 = vadd.f32 %v917, %v1241
    %v1306 = vadd.f32 %v918, %v1242
    %v1307 = vadd.f32 %v919, %v1243
    %v1308 = vadd.f32 %v920, %v1244
    %v1309 = vadd.f32 %v921, %v1245
    %v1310 = vadd.f32 %v922, %v1246
    %v1311 = vadd.f32 %v923, %v1247
    %v1312 = vadd.f32 %v924, %v1248
    %v1313 = vadd.f32 %v925, %v1249
    %v1314 = vadd.f32 %v926, %v1250
    %v1315 = vadd.f32 %v927, %v1251
    %v1316 = vadd.f32 %v928, %v1252
    %v1317 = vadd.f32 %v929, %v1253
    %v1318 = vadd.f32 %v930, %v1254
    %v1319 = vadd.f32 %v931, %v1255
    %v1320 = vadd.f32 %v932, %v1256
    %v1321 = vadd.f32 %v933, %v1257
    %v1322 = vadd.f32 %v934, %v1258
    %v1323 = vadd.f32 %v935, %v1259
    %v1324 = vadd.f32 %v936, %v1260
    %1325 = vset.pattern.permute.xlu0 3
    %1326 = vperm.xlu0 %1325, %v95
    %v1327 = vpop.permute.xlu0 %1326
    %1329 = vset.pattern.permute.xlu0 3
    %1330 = vperm.xlu0 %1329, %v96
    %v1331 = vpop.permute.xlu0 %1330
    %1333 = vset.pattern.permute.xlu0 3
    %1334 = vperm.xlu0 %1333, %v97
    %v1335 = vpop.permute.xlu0 %1334
    %1337 = vset.pattern.permute.xlu0 3
    %1338 = vperm.xlu0 %1337, %v98
    %v1339 = vpop.permute.xlu0 %1338
    %1341 = vset.pattern.permute.xlu0 3
    %1342 = vperm.xlu0 %1341, %v99
    %v1343 = vpop.permute.xlu0 %1342
    %1345 = vset.pattern.permute.xlu0 3
    %1346 = vperm.xlu0 %1345, %v100
    %v1347 = vpop.permute.xlu0 %1346
    %1349 = vset.pattern.permute.xlu0 3
    %1350 = vperm.xlu0 %1349, %v101
    %v1351 = vpop.permute.xlu0 %1350
    %1353 = vset.pattern.permute.xlu0 3
    %1354 = vperm.xlu0 %1353, %v102
    %v1355 = vpop.permute.xlu0 %1354
    %1357 = vset.pattern.permute.xlu0 3
    %1358 = vperm.xlu0 %1357, %v103
    %v1359 = vpop.permute.xlu0 %1358
    %1361 = vset.pattern.permute.xlu0 3
    %1362 = vperm.xlu0 %1361, %v104
    %v1363 = vpop.permute.xlu0 %1362
    %1365 = vset.pattern.permute.xlu0 3
    %1366 = vperm.xlu0 %1365, %v105
    %v1367 = vpop.permute.xlu0 %1366
    %1369 = vset.pattern.permute.xlu0 3
    %1370 = vperm.xlu0 %1369, %v106
    %v1371 = vpop.permute.xlu0 %1370
    %1373 = vset.pattern.permute.xlu0 3
    %1374 = vperm.xlu0 %1373, %v107
    %v1375 = vpop.permute.xlu0 %1374
    %1377 = vset.pattern.permute.xlu0 3
    %1378 = vperm.xlu0 %1377, %v108
    %v1379 = vpop.permute.xlu0 %1378
    %1381 = vset.pattern.permute.xlu0 3
    %1382 = vperm.xlu0 %1381, %v109
    %v1383 = vpop.permute.xlu0 %1382
    %1385 = vset.pattern.permute.xlu0 3
    %1386 = vperm.xlu0 %1385, %v110
    %v1387 = vpop.permute.xlu0 %1386
    %1389 = vset.pattern.permute.xlu0 3
    %1390 = vperm.xlu0 %1389, %v111
    %v1391 = vpop.permute.xlu0 %1390
    %1393 = vset.pattern.permute.xlu0 3
    %1394 = vperm.xlu0 %1393, %v112
    %v1395 = vpop.permute.xlu0 %1394
    %1397 = vset.pattern.permute.xlu0 3
    %1398 = vperm.xlu0 %1397, %v113
    %v1399 = vpop.permute.xlu0 %1398
    %1401 = vset.pattern.permute.xlu0 3
    %1402 = vperm.xlu0 %1401, %v114
    %v1403 = vpop.permute.xlu0 %1402
    %1405 = vset.pattern.permute.xlu0 3
    %1406 = vperm.xlu0 %1405, %v115
    %v1407 = vpop.permute.xlu0 %1406
    %1409 = vset.pattern.permute.xlu0 3
    %1410 = vperm.xlu0 %1409, %v116
    %v1411 = vpop.permute.xlu0 %1410
    %1413 = vset.pattern.permute.xlu0 3
    %1414 = vperm.xlu0 %1413, %v117
    %v1415 = vpop.permute.xlu0 %1414
    %1417 = vset.pattern.permute.xlu0 3
    %1418 = vperm.xlu0 %1417, %v118
    %v1419 = vpop.permute.xlu0 %1418
    %1421 = vset.pattern.permute.xlu0 3
    %1422 = vperm.xlu0 %1421, %v119
    %v1423 = vpop.permute.xlu0 %1422
    %1425 = vset.pattern.permute.xlu0 3
    %1426 = vperm.xlu0 %1425, %v120
    %v1427 = vpop.permute.xlu0 %1426
    %1429 = vset.pattern.permute.xlu0 3
    %1430 = vperm.xlu0 %1429, %v121
    %v1431 = vpop.permute.xlu0 %1430
    %1433 = vset.pattern.permute.xlu0 3
    %1434 = vperm.xlu0 %1433, %v122
    %v1435 = vpop.permute.xlu0 %1434
    %1437 = vset.pattern.permute.xlu0 3
    %1438 = vperm.xlu0 %1437, %v123
    %v1439 = vpop.permute.xlu0 %1438
    %1441 = vset.pattern.permute.xlu0 3
    %1442 = vperm.xlu0 %1441, %v124
    %v1443 = vpop.permute.xlu0 %1442
    %1445 = vset.pattern.permute.xlu0 3
    %1446 = vperm.xlu0 %1445, %v125
    %v1447 = vpop.permute.xlu0 %1446
    %1449 = vset.pattern.permute.xlu0 3
    %1450 = vperm.xlu0 %1449, %v126
    %v1451 = vpop.permute.xlu0 %1450
    %1453 = vset.pattern.permute.xlu0 3
    %1454 = vperm.xlu0 %1453, %v127
    %v1455 = vpop.permute.xlu0 %1454
    %1457 = vset.pattern.permute.xlu0 3
    %1458 = vperm.xlu0 %1457, %v128
    %v1459 = vpop.permute.xlu0 %1458
    %1461 = vset.pattern.permute.xlu0 3
    %1462 = vperm.xlu0 %1461, %v129
    %v1463 = vpop.permute.xlu0 %1462
    %1465 = vset.pattern.permute.xlu0 3
    %1466 = vperm.xlu0 %1465, %v130
    %v1467 = vpop.permute.xlu0 %1466
    %1469 = vset.pattern.permute.xlu0 3
    %1470 = vperm.xlu0 %1469, %v131
    %v1471 = vpop.permute.xlu0 %1470
    %1473 = vset.pattern.permute.xlu0 3
    %1474 = vperm.xlu0 %1473, %v132
    %v1475 = vpop.permute.xlu0 %1474
    %1477 = vset.pattern.permute.xlu0 3
    %1478 = vperm.xlu0 %1477, %v133
    %v1479 = vpop.permute.xlu0 %1478
    %1481 = vset.pattern.permute.xlu0 3
    %1482 = vperm.xlu0 %1481, %v134
    %v1483 = vpop.permute.xlu0 %1482
    %1485 = vset.pattern.permute.xlu0 3
    %1486 = vperm.xlu0 %1485, %v135
    %v1487 = vpop.permute.xlu0 %1486
    %1489 = vset.pattern.permute.xlu0 3
    %1490 = vperm.xlu0 %1489, %v136
    %v1491 = vpop.permute.xlu0 %1490
    %1493 = vset.pattern.permute.xlu0 3
    %1494 = vperm.xlu0 %1493, %v137
    %v1495 = vpop.permute.xlu0 %1494
    %1497 = vset.pattern.permute.xlu0 3
    %1498 = vperm.xlu0 %1497, %v138
    %v1499 = vpop.permute.xlu0 %1498
    %1501 = vset.pattern.permute.xlu0 3
    %1502 = vperm.xlu0 %1501, %v139
    %v1503 = vpop.permute.xlu0 %1502
    %1505 = vset.pattern.permute.xlu0 3
    %1506 = vperm.xlu0 %1505, %v140
    %v1507 = vpop.permute.xlu0 %1506
    %1509 = vset.pattern.permute.xlu0 3
    %1510 = vperm.xlu0 %1509, %v141
    %v1511 = vpop.permute.xlu0 %1510
    %1513 = vset.pattern.permute.xlu0 3
    %1514 = vperm.xlu0 %1513, %v142
    %v1515 = vpop.permute.xlu0 %1514
    %1517 = vset.pattern.permute.xlu0 3
    %1518 = vperm.xlu0 %1517, %v143
    %v1519 = vpop.permute.xlu0 %1518
    %1521 = vset.pattern.permute.xlu0 3
    %1522 = vperm.xlu0 %1521, %v144
    %v1523 = vpop.permute.xlu0 %1522
    %1525 = vset.pattern.permute.xlu0 3
    %1526 = vperm.xlu0 %1525, %v145
    %v1527 = vpop.permute.xlu0 %1526
    %1529 = vset.pattern.permute.xlu0 3
    %1530 = vperm.xlu0 %1529, %v146
    %v1531 = vpop.permute.xlu0 %1530
    %1533 = vset.pattern.permute.xlu0 3
    %1534 = vperm.xlu0 %1533, %v147
    %v1535 = vpop.permute.xlu0 %1534
    %1537 = vset.pattern.permute.xlu0 3
    %1538 = vperm.xlu0 %1537, %v148
    %v1539 = vpop.permute.xlu0 %1538
    %1541 = vset.pattern.permute.xlu0 3
    %1542 = vperm.xlu0 %1541, %v149
    %v1543 = vpop.permute.xlu0 %1542
    %1545 = vset.pattern.permute.xlu0 3
    %1546 = vperm.xlu0 %1545, %v150
    %v1547 = vpop.permute.xlu0 %1546
    %1549 = vset.pattern.permute.xlu0 3
    %1550 = vperm.xlu0 %1549, %v151
    %v1551 = vpop.permute.xlu0 %1550
    %1553 = vset.pattern.permute.xlu0 3
    %1554 = vperm.xlu0 %1553, %v152
    %v1555 = vpop.permute.xlu0 %1554
    %1557 = vset.pattern.permute.xlu0 3
    %1558 = vperm.xlu0 %1557, %v153
    %v1559 = vpop.permute.xlu0 %1558
    %1561 = vset.pattern.permute.xlu0 3
    %1562 = vperm.xlu0 %1561, %v154
    %v1563 = vpop.permute.xlu0 %1562
    %1565 = vset.pattern.permute.xlu0 3
    %1566 = vperm.xlu0 %1565, %v155
    %v1567 = vpop.permute.xlu0 %1566
    %1569 = vset.pattern.permute.xlu0 3
    %1570 = vperm.xlu0 %1569, %v156
    %v1571 = vpop.permute.xlu0 %1570
    %1573 = vset.pattern.permute.xlu0 3
    %1574 = vperm.xlu0 %1573, %v157
    %v1575 = vpop.permute.xlu0 %1574
    %1577 = vset.pattern.permute.xlu0 3
    %1578 = vperm.xlu0 %1577, %v158
    %v1579 = vpop.permute.xlu0 %1578
    %v1581 = vlaneseq
    %v1582 = vshrl.u32 %v1581, 7
    %v1583 = vsub.s32 3, %v1582
    %v1584 = vrot.slane %v160, %v1583
    %v1585 = vmul.f32 %v1327, %v1584
    %v1586 = vmul.f32 %v1331, %v1584
    %v1587 = vmul.f32 %v1335, %v1584
    %v1588 = vmul.f32 %v1339, %v1584
    %v1589 = vmul.f32 %v1343, %v1584
    %v1590 = vmul.f32 %v1347, %v1584
    %v1591 = vmul.f32 %v1351, %v1584
    %v1592 = vmul.f32 %v1355, %v1584
    %v1593 = vmul.f32 %v1359, %v1584
    %v1594 = vmul.f32 %v1363, %v1584
    %v1595 = vmul.f32 %v1367, %v1584
    %v1596 = vmul.f32 %v1371, %v1584
    %v1597 = vmul.f32 %v1375, %v1584
    %v1598 = vmul.f32 %v1379, %v1584
    %v1599 = vmul.f32 %v1383, %v1584
    %v1600 = vmul.f32 %v1387, %v1584
    %v1601 = vmul.f32 %v1391, %v1584
    %v1602 = vmul.f32 %v1395, %v1584
    %v1603 = vmul.f32 %v1399, %v1584
    %v1604 = vmul.f32 %v1403, %v1584
    %v1605 = vmul.f32 %v1407, %v1584
    %v1606 = vmul.f32 %v1411, %v1584
    %v1607 = vmul.f32 %v1415, %v1584
    %v1608 = vmul.f32 %v1419, %v1584
    %v1609 = vmul.f32 %v1423, %v1584
    %v1610 = vmul.f32 %v1427, %v1584
    %v1611 = vmul.f32 %v1431, %v1584
    %v1612 = vmul.f32 %v1435, %v1584
    %v1613 = vmul.f32 %v1439, %v1584
    %v1614 = vmul.f32 %v1443, %v1584
    %v1615 = vmul.f32 %v1447, %v1584
    %v1616 = vmul.f32 %v1451, %v1584
    %v1617 = vmul.f32 %v1455, %v1584
    %v1618 = vmul.f32 %v1459, %v1584
    %v1619 = vmul.f32 %v1463, %v1584
    %v1620 = vmul.f32 %v1467, %v1584
    %v1621 = vmul.f32 %v1471, %v1584
    %v1622 = vmul.f32 %v1475, %v1584
    %v1623 = vmul.f32 %v1479, %v1584
    %v1624 = vmul.f32 %v1483, %v1584
    %v1625 = vmul.f32 %v1487, %v1584
    %v1626 = vmul.f32 %v1491, %v1584
    %v1627 = vmul.f32 %v1495, %v1584
    %v1628 = vmul.f32 %v1499, %v1584
    %v1629 = vmul.f32 %v1503, %v1584
    %v1630 = vmul.f32 %v1507, %v1584
    %v1631 = vmul.f32 %v1511, %v1584
    %v1632 = vmul.f32 %v1515, %v1584
    %v1633 = vmul.f32 %v1519, %v1584
    %v1634 = vmul.f32 %v1523, %v1584
    %v1635 = vmul.f32 %v1527, %v1584
    %v1636 = vmul.f32 %v1531, %v1584
    %v1637 = vmul.f32 %v1535, %v1584
    %v1638 = vmul.f32 %v1539, %v1584
    %v1639 = vmul.f32 %v1543, %v1584
    %v1640 = vmul.f32 %v1547, %v1584
    %v1641 = vmul.f32 %v1551, %v1584
    %v1642 = vmul.f32 %v1555, %v1584
    %v1643 = vmul.f32 %v1559, %v1584
    %v1644 = vmul.f32 %v1563, %v1584
    %v1645 = vmul.f32 %v1567, %v1584
    %v1646 = vmul.f32 %v1571, %v1584
    %v1647 = vmul.f32 %v1575, %v1584
    %v1648 = vmul.f32 %v1579, %v1584
    %v1649 = vadd.f32 %v1261, %v1585
    %v1650 = vadd.f32 %v1262, %v1586
    %v1651 = vadd.f32 %v1263, %v1587
    %v1652 = vadd.f32 %v1264, %v1588
    %v1653 = vadd.f32 %v1265, %v1589
    %v1654 = vadd.f32 %v1266, %v1590
    %v1655 = vadd.f32 %v1267, %v1591
    %v1656 = vadd.f32 %v1268, %v1592
    %v1657 = vadd.f32 %v1269, %v1593
    %v1658 = vadd.f32 %v1270, %v1594
    %v1659 = vadd.f32 %v1271, %v1595
    %v1660 = vadd.f32 %v1272, %v1596
    %v1661 = vadd.f32 %v1273, %v1597
    %v1662 = vadd.f32 %v1274, %v1598
    %v1663 = vadd.f32 %v1275, %v1599
    %v1664 = vadd.f32 %v1276, %v1600
    %v1665 = vadd.f32 %v1277, %v1601
    %v1666 = vadd.f32 %v1278, %v1602
    %v1667 = vadd.f32 %v1279, %v1603
    %v1668 = vadd.f32 %v1280, %v1604
    %v1669 = vadd.f32 %v1281, %v1605
    %v1670 = vadd.f32 %v1282, %v1606
    %v1671 = vadd.f32 %v1283, %v1607
    %v1672 = vadd.f32 %v1284, %v1608
    %v1673 = vadd.f32 %v1285, %v1609
    %v1674 = vadd.f32 %v1286, %v1610
    %v1675 = vadd.f32 %v1287, %v1611
    %v1676 = vadd.f32 %v1288, %v1612
    %v1677 = vadd.f32 %v1289, %v1613
    %v1678 = vadd.f32 %v1290, %v1614
    %v1679 = vadd.f32 %v1291, %v1615
    %v1680 = vadd.f32 %v1292, %v1616
    %v1681 = vadd.f32 %v1293, %v1617
    %v1682 = vadd.f32 %v1294, %v1618
    %v1683 = vadd.f32 %v1295, %v1619
    %v1684 = vadd.f32 %v1296, %v1620
    %v1685 = vadd.f32 %v1297, %v1621
    %v1686 = vadd.f32 %v1298, %v1622
    %v1687 = vadd.f32 %v1299, %v1623
    %v1688 = vadd.f32 %v1300, %v1624
    %v1689 = vadd.f32 %v1301, %v1625
    %v1690 = vadd.f32 %v1302, %v1626
    %v1691 = vadd.f32 %v1303, %v1627
    %v1692 = vadd.f32 %v1304, %v1628
    %v1693 = vadd.f32 %v1305, %v1629
    %v1694 = vadd.f32 %v1306, %v1630
    %v1695 = vadd.f32 %v1307, %v1631
    %v1696 = vadd.f32 %v1308, %v1632
    %v1697 = vadd.f32 %v1309, %v1633
    %v1698 = vadd.f32 %v1310, %v1634
    %v1699 = vadd.f32 %v1311, %v1635
    %v1700 = vadd.f32 %v1312, %v1636
    %v1701 = vadd.f32 %v1313, %v1637
    %v1702 = vadd.f32 %v1314, %v1638
    %v1703 = vadd.f32 %v1315, %v1639
    %v1704 = vadd.f32 %v1316, %v1640
    %v1705 = vadd.f32 %v1317, %v1641
    %v1706 = vadd.f32 %v1318, %v1642
    %v1707 = vadd.f32 %v1319, %v1643
    %v1708 = vadd.f32 %v1320, %v1644
    %v1709 = vadd.f32 %v1321, %v1645
    %v1710 = vadd.f32 %v1322, %v1646
    %v1711 = vadd.f32 %v1323, %v1647
    %v1712 = vadd.f32 %v1324, %v1648
    %v1713 = vld [vmem:[%s2] sm:$0x1]
    %v1715 = vlaneseq
    %v1716 = vshrl.u32 %v1715, 7
    %v1717 = vsub.s32 0, %v1716
    %v1718 = vrot.slane %v1713, %v1717
    %v1720 = vadd.f32 %v1649, %v1718
    %v1721 = vadd.f32 %v1650, %v1718
    %v1722 = vadd.f32 %v1651, %v1718
    %v1723 = vadd.f32 %v1652, %v1718
    %v1724 = vadd.f32 %v1653, %v1718
    %v1725 = vadd.f32 %v1654, %v1718
    %v1726 = vadd.f32 %v1655, %v1718
    %v1727 = vadd.f32 %v1656, %v1718
    %v1728 = vadd.f32 %v1657, %v1718
    %v1729 = vadd.f32 %v1658, %v1718
    %v1730 = vadd.f32 %v1659, %v1718
    %v1731 = vadd.f32 %v1660, %v1718
    %v1732 = vadd.f32 %v1661, %v1718
    %v1733 = vadd.f32 %v1662, %v1718
    %v1734 = vadd.f32 %v1663, %v1718
    %v1735 = vadd.f32 %v1664, %v1718
    %v1736 = vadd.f32 %v1665, %v1718
    %v1737 = vadd.f32 %v1666, %v1718
    %v1738 = vadd.f32 %v1667, %v1718
    %v1739 = vadd.f32 %v1668, %v1718
    %v1740 = vadd.f32 %v1669, %v1718
    %v1741 = vadd.f32 %v1670, %v1718
    %v1742 = vadd.f32 %v1671, %v1718
    %v1743 = vadd.f32 %v1672, %v1718
    %v1744 = vadd.f32 %v1673, %v1718
    %v1745 = vadd.f32 %v1674, %v1718
    %v1746 = vadd.f32 %v1675, %v1718
    %v1747 = vadd.f32 %v1676, %v1718
    %v1748 = vadd.f32 %v1677, %v1718
    %v1749 = vadd.f32 %v1678, %v1718
    %v1750 = vadd.f32 %v1679, %v1718
    %v1751 = vadd.f32 %v1680, %v1718
    %v1752 = vadd.f32 %v1681, %v1718
    %v1753 = vadd.f32 %v1682, %v1718
    %v1754 = vadd.f32 %v1683, %v1718
    %v1755 = vadd.f32 %v1684, %v1718
    %v1756 = vadd.f32 %v1685, %v1718
    %v1757 = vadd.f32 %v1686, %v1718
    %v1758 = vadd.f32 %v1687, %v1718
    %v1759 = vadd.f32 %v1688, %v1718
    %v1760 = vadd.f32 %v1689, %v1718
    %v1761 = vadd.f32 %v1690, %v1718
    %v1762 = vadd.f32 %v1691, %v1718
    %v1763 = vadd.f32 %v1692, %v1718
    %v1764 = vadd.f32 %v1693, %v1718
    %v1765 = vadd.f32 %v1694, %v1718
    %v1766 = vadd.f32 %v1695, %v1718
    %v1767 = vadd.f32 %v1696, %v1718
    %v1768 = vadd.f32 %v1697, %v1718
    %v1769 = vadd.f32 %v1698, %v1718
    %v1770 = vadd.f32 %v1699, %v1718
    %v1771 = vadd.f32 %v1700, %v1718
    %v1772 = vadd.f32 %v1701, %v1718
    %v1773 = vadd.f32 %v1702, %v1718
    %v1774 = vadd.f32 %v1703, %v1718
    %v1775 = vadd.f32 %v1704, %v1718
    %v1776 = vadd.f32 %v1705, %v1718
    %v1777 = vadd.f32 %v1706, %v1718
    %v1778 = vadd.f32 %v1707, %v1718
    %v1779 = vadd.f32 %v1708, %v1718
    %v1780 = vadd.f32 %v1709, %v1718
    %v1781 = vadd.f32 %v1710, %v1718
    %v1782 = vadd.f32 %v1711, %v1718
    %v1783 = vadd.f32 %v1712, %v1718
    %v1784 = vmax.f32 %v1720, 0.0
    %v1785 = vmax.f32 %v1721, 0.0
    %v1786 = vmax.f32 %v1722, 0.0
    %v1787 = vmax.f32 %v1723, 0.0
    %v1788 = vmax.f32 %v1724, 0.0
    %v1789 = vmax.f32 %v1725, 0.0
    %v1790 = vmax.f32 %v1726, 0.0
    %v1791 = vmax.f32 %v1727, 0.0
    %v1792 = vmax.f32 %v1728, 0.0
    %v1793 = vmax.f32 %v1729, 0.0
    %v1794 = vmax.f32 %v1730, 0.0
    %v1795 = vmax.f32 %v1731, 0.0
    %v1796 = vmax.f32 %v1732, 0.0
    %v1797 = vmax.f32 %v1733, 0.0
    %v1798 = vmax.f32 %v1734, 0.0
    %v1799 = vmax.f32 %v1735, 0.0
    %v1800 = vmax.f32 %v1736, 0.0
    %v1801 = vmax.f32 %v1737, 0.0
    %v1802 = vmax.f32 %v1738, 0.0
    %v1803 = vmax.f32 %v1739, 0.0
    %v1804 = vmax.f32 %v1740, 0.0
    %v1805 = vmax.f32 %v1741, 0.0
    %v1806 = vmax.f32 %v1742, 0.0
    %v1807 = vmax.f32 %v1743, 0.0
    %v1808 = vmax.f32 %v1744, 0.0
    %v1809 = vmax.f32 %v1745, 0.0
    %v1810 = vmax.f32 %v1746, 0.0
    %v1811 = vmax.f32 %v1747, 0.0
    %v1812 = vmax.f32 %v1748, 0.0
    %v1813 = vmax.f32 %v1749, 0.0
    %v1814 = vmax.f32 %v1750, 0.0
    %v1815 = vmax.f32 %v1751, 0.0
    %v1816 = vmax.f32 %v1752, 0.0
    %v1817 = vmax.f32 %v1753, 0.0
    %v1818 = vmax.f32 %v1754, 0.0
    %v1819 = vmax.f32 %v1755, 0.0
    %v1820 = vmax.f32 %v1756, 0.0
    %v1821 = vmax.f32 %v1757, 0.0
    %v1822 = vmax.f32 %v1758, 0.0
    %v1823 = vmax.f32 %v1759, 0.0
    %v1824 = vmax.f32 %v1760, 0.0
    %v1825 = vmax.f32 %v1761, 0.0
    %v1826 = vmax.f32 %v1762, 0.0
    %v1827 = vmax.f32 %v1763, 0.0
    %v1828 = vmax.f32 %v1764, 0.0
    %v1829 = vmax.f32 %v1765, 0.0
    %v1830 = vmax.f32 %v1766, 0.0
    %v1831 = vmax.f32 %v1767, 0.0
    %v1832 = vmax.f32 %v1768, 0.0
    %v1833 = vmax.f32 %v1769, 0.0
    %v1834 = vmax.f32 %v1770, 0.0
    %v1835 = vmax.f32 %v1771, 0.0
    %v1836 = vmax.f32 %v1772, 0.0
    %v1837 = vmax.f32 %v1773, 0.0
    %v1838 = vmax.f32 %v1774, 0.0
    %v1839 = vmax.f32 %v1775, 0.0
    %v1840 = vmax.f32 %v1776, 0.0
    %v1841 = vmax.f32 %v1777, 0.0
    %v1842 = vmax.f32 %v1778, 0.0
    %v1843 = vmax.f32 %v1779, 0.0
    %v1844 = vmax.f32 %v1780, 0.0
    %v1845 = vmax.f32 %v1781, 0.0
    %v1846 = vmax.f32 %v1782, 0.0
    %v1847 = vmax.f32 %v1783, 0.0
    %v1848 = vld [vmem:[#allocation2] sm:$0x3]
    %vm1849 = vcmask 261120
    %v1850 = vsel %vm1849, %v1784, 0.0
    %v1851 = vsel %vm1849, %v1785, 0.0
    %v1852 = vadd.f32 %v1850, %v1851
    %v1853 = vsel %vm1849, %v1786, 0.0
    %v1854 = vadd.f32 %v1852, %v1853
    %v1855 = vsel %vm1849, %v1787, 0.0
    %v1856 = vadd.f32 %v1854, %v1855
    %v1857 = vsel %vm1849, %v1788, 0.0
    %v1858 = vadd.f32 %v1856, %v1857
    %v1859 = vsel %vm1849, %v1789, 0.0
    %v1860 = vadd.f32 %v1858, %v1859
    %v1861 = vsel %vm1849, %v1790, 0.0
    %v1862 = vadd.f32 %v1860, %v1861
    %v1863 = vsel %vm1849, %v1791, 0.0
    %v1864 = vadd.f32 %v1862, %v1863
    %v1865 = vsel %vm1849, %v1792, 0.0
    %v1866 = vadd.f32 %v1864, %v1865
    %v1867 = vsel %vm1849, %v1793, 0.0
    %v1868 = vadd.f32 %v1866, %v1867
    %v1869 = vsel %vm1849, %v1794, 0.0
    %v1870 = vadd.f32 %v1868, %v1869
    %v1871 = vsel %vm1849, %v1795, 0.0
    %v1872 = vadd.f32 %v1870, %v1871
    %v1873 = vsel %vm1849, %v1796, 0.0
    %v1874 = vadd.f32 %v1872, %v1873
    %v1875 = vsel %vm1849, %v1797, 0.0
    %v1876 = vadd.f32 %v1874, %v1875
    %v1877 = vsel %vm1849, %v1798, 0.0
    %v1878 = vadd.f32 %v1876, %v1877
    %v1879 = vsel %vm1849, %v1799, 0.0
    %v1880 = vadd.f32 %v1878, %v1879
    %v1881 = vsel %vm1849, %v1800, 0.0
    %v1882 = vadd.f32 %v1880, %v1881
    %v1883 = vsel %vm1849, %v1801, 0.0
    %v1884 = vadd.f32 %v1882, %v1883
    %v1885 = vsel %vm1849, %v1802, 0.0
    %v1886 = vadd.f32 %v1884, %v1885
    %v1887 = vsel %vm1849, %v1803, 0.0
    %v1888 = vadd.f32 %v1886, %v1887
    %v1889 = vsel %vm1849, %v1804, 0.0
    %v1890 = vadd.f32 %v1888, %v1889
    %v1891 = vsel %vm1849, %v1805, 0.0
    %v1892 = vadd.f32 %v1890, %v1891
    %v1893 = vsel %vm1849, %v1806, 0.0
    %v1894 = vadd.f32 %v1892, %v1893
    %v1895 = vsel %vm1849, %v1807, 0.0
    %v1896 = vadd.f32 %v1894, %v1895
    %v1897 = vsel %vm1849, %v1808, 0.0
    %v1898 = vadd.f32 %v1896, %v1897
    %v1899 = vsel %vm1849, %v1809, 0.0
    %v1900 = vadd.f32 %v1898, %v1899
    %v1901 = vsel %vm1849, %v1810, 0.0
    %v1902 = vadd.f32 %v1900, %v1901
    %v1903 = vsel %vm1849, %v1811, 0.0
    %v1904 = vadd.f32 %v1902, %v1903
    %v1905 = vsel %vm1849, %v1812, 0.0
    %v1906 = vadd.f32 %v1904, %v1905
    %v1907 = vsel %vm1849, %v1813, 0.0
    %v1908 = vadd.f32 %v1906, %v1907
    %v1909 = vsel %vm1849, %v1814, 0.0
    %v1910 = vadd.f32 %v1908, %v1909
    %v1911 = vsel %vm1849, %v1815, 0.0
    %v1912 = vadd.f32 %v1910, %v1911
    %v1913 = vrot.slane %v1912, 4
    %v1914 = vadd.f32 %v1912, %v1913
    %v1915 = vrot.slane %v1914, 2
    %v1916 = vadd.f32 %v1914, %v1915
    %v1917 = vrot.slane %v1916, 1
    %v1918 = vadd.f32 %v1916, %v1917
    %v1919 = vsel %vm1849, %v1816, 0.0
    %v1920 = vsel %vm1849, %v1817, 0.0
    %v1921 = vadd.f32 %v1919, %v1920
    %v1922 = vsel %vm1849, %v1818, 0.0
    %v1923 = vadd.f32 %v1921, %v1922
    %v1924 = vsel %vm1849, %v1819, 0.0
    %v1925 = vadd.f32 %v1923, %v1924
    %v1926 = vsel %vm1849, %v1820, 0.0
    %v1927 = vadd.f32 %v1925, %v1926
    %v1928 = vsel %vm1849, %v1821, 0.0
    %v1929 = vadd.f32 %v1927, %v1928
    %v1930 = vsel %vm1849, %v1822, 0.0
    %v1931 = vadd.f32 %v1929, %v1930
    %v1932 = vsel %vm1849, %v1823, 0.0
    %v1933 = vadd.f32 %v1931, %v1932
    %v1934 = vsel %vm1849, %v1824, 0.0
    %v1935 = vadd.f32 %v1933, %v1934
    %v1936 = vsel %vm1849, %v1825, 0.0
    %v1937 = vadd.f32 %v1935, %v1936
    %v1938 = vsel %vm1849, %v1826, 0.0
    %v1939 = vadd.f32 %v1937, %v1938
    %v1940 = vsel %vm1849, %v1827, 0.0
    %v1941 = vadd.f32 %v1939, %v1940
    %v1942 = vsel %vm1849, %v1828, 0.0
    %v1943 = vadd.f32 %v1941, %v1942
    %v1944 = vsel %vm1849, %v1829, 0.0
    %v1945 = vadd.f32 %v1943, %v1944
    %v1946 = vsel %vm1849, %v1830, 0.0
    %v1947 = vadd.f32 %v1945, %v1946
    %v1948 = vsel %vm1849, %v1831, 0.0
    %v1949 = vadd.f32 %v1947, %v1948
    %v1950 = vsel %vm1849, %v1832, 0.0
    %v1951 = vadd.f32 %v1949, %v1950
    %v1952 = vsel %vm1849, %v1833, 0.0
    %v1953 = vadd.f32 %v1951, %v1952
    %v1954 = vsel %vm1849, %v1834, 0.0
    %v1955 = vadd.f32 %v1953, %v1954
    %v1956 = vsel %vm1849, %v1835, 0.0
    %v1957 = vadd.f32 %v1955, %v1956
    %v1958 = vsel %vm1849, %v1836, 0.0
    %v1959 = vadd.f32 %v1957, %v1958
    %v1960 = vsel %vm1849, %v1837, 0.0
    %v1961 = vadd.f32 %v1959, %v1960
    %v1962 = vsel %vm1849, %v1838, 0.0
    %v1963 = vadd.f32 %v1961, %v1962
    %v1964 = vsel %vm1849, %v1839, 0.0
    %v1965 = vadd.f32 %v1963, %v1964
    %v1966 = vsel %vm1849, %v1840, 0.0
    %v1967 = vadd.f32 %v1965, %v1966
    %v1968 = vsel %vm1849, %v1841, 0.0
    %v1969 = vadd.f32 %v1967, %v1968
    %v1970 = vsel %vm1849, %v1842, 0.0
    %v1971 = vadd.f32 %v1969, %v1970
    %v1972 = vsel %vm1849, %v1843, 0.0
    %v1973 = vadd.f32 %v1971, %v1972
    %v1974 = vsel %vm1849, %v1844, 0.0
    %v1975 = vadd.f32 %v1973, %v1974
    %v1976 = vsel %vm1849, %v1845, 0.0
    %v1977 = vadd.f32 %v1975, %v1976
    %v1978 = vsel %vm1849, %v1846, 0.0
    %v1979 = vadd.f32 %v1977, %v1978
    %v1980 = vsel %vm1849, %v1847, 0.0
    %v1981 = vadd.f32 %v1979, %v1980
    %v1982 = vrot.slane %v1981, 4
    %v1983 = vadd.f32 %v1981, %v1982
    %v1984 = vrot.slane %v1983, 2
    %v1985 = vadd.f32 %v1983, %v1984
    %v1986 = vrot.slane %v1985, 1
    %v1987 = vadd.f32 %v1985, %v1986
    %vm1990 = vcmask 1041409
    %v1991 = vsel %vm1990, %v1987, %v1918
    %v1993 = vadd.f32 %v1848, %v1991
    %vm1994 = vcmask 254976
    %1995 = vst.msk [vmem:[#allocation2] sm:$0x3] %vm1994, %v1993
    // Predicated region
    $region30: #{tpu_custom_call.1} parent=1 // pred_check
      %p1996 = pneg %p25
    $region31: #{tpu_custom_call.1} parent=1 // pred_check_branch
      %1998 = sbr.rel (%p1996) target = $region33
    $region32: #{tpu_custom_call.1} parent=1 // pred_region
      %v1999 = vld [vmem:[#allocation2] sm:$0x3]
      %v2000 = vld [vmem:[%s4] sm:$0x3]
      %v2001 = vld [vmem:[%s3] sm:$0x1]
      %v2003 = vlaneseq
      %v2004 = vshrl.u32 %v2003, 7
      %v2005 = vsub.s32 0, %v2004
      %v2006 = vrot.slane %v2001, %v2005
      %v2008 = vadd.f32 %v2000, %v2006
      %v2009 = vmul.f32 %v1999, %v2008
      %v2010 = vsel %vm1994, %v2009, 0.0
      %2011 = vadd.xlane.f32.xlu0 %v2010
      %v2012 = vpop.xlane.xlu0 %2011
      %s2013 = sld [smem:[#allocation3]]
      %v2014 = vstv %s2013
      %v2015 = vadd.f32 %v2012, %v2014
      %v2017 = vlaneseq
      %v2018 = vand.u32 %v2017, 127
      %v2019 = vlaneseq
      %v2020 = vshrl.u32 %v2019, 7
      %v2021 = vsub.s32 %v2018, %v2020
      %v2022 = vrot.slane %v2015, %v2021
      %vm2024 = vcmask 8192
      %2025 = vst.msk [vmem:[#allocation4] sm:$0x1] %vm2024, %v2022
    $region33: #{tpu_custom_call.1} parent=1 // pred_fallthru
      _
    // Predicated region
    $region34: #{tpu_custom_call.1} parent=1 // pred_check
      _
    $region35: #{tpu_custom_call.1} parent=1 // pred_check_branch
      %2027 = sbr.rel (0) target = $region37
    $region36: #{tpu_custom_call.1} parent=1 // pred_region
      %s2029 = ssub.s32 16, 16
      %2030 = vsyncadd [#allocation5], %s2029
      %s2032 = sshll.u32 [#allocation4], 4
      %s2033 = int_to_ptr.vmem [resolvable:$true] %s2032
      %2035 = dma.vmem_to_hbm [thread:$0]  %s2033, 16, %s6, [#allocation5]
    $region37: #{tpu_custom_call.1} parent=1 // pred_fallthru
      _
    // Predicated region
    $region38: #{tpu_custom_call.1} parent=1 // pred_check
      _
    $region39: #{tpu_custom_call.1} parent=1 // pred_check_branch
      %2037 = sbr.rel (0) target = $region41
    $region40: #{tpu_custom_call.1} parent=1 // pred_region
      %2038 = dma.done [#allocation5], 16
    $region41: #{tpu_custom_call.1} parent=1 // pred_fallthru
      _
    %2039 = vsyncpa [#allocation5], 1

</llo_original>
